<compile_context>
chip_gen: v7x
topology: tpu7x:2x2x1
jax: 0.10.0
libtpu: 0.0.40
codegen_flags: <defaults>
</compile_context>

<pallas_src>
import jax
import jax.numpy as jnp
from jax.experimental import pallas as pl
from jax.experimental.pallas import tpu as pltpu


def gat_batched_kernel(x_ref, n_ref, u1_ref, u2m_ref, e_ref, m_ref, o_ref):
    # Per grid step (block of Bt nodes):
    #   x_ref  : (Bt, Si)         node features                 (compute dtype)
    #   n_ref  : (Bt, N*Si)       flat neighbour features       (compute dtype)
    #   u1_ref : (1, Si)          a1^T W                        (f32, resident)
    #   u2m_ref: (N*Si, N)        kron(a2^T W, I_N)             (compute dtype, resident)
    #   e_ref  : (N, N*Si)        0/1 "repeat alpha over Si lanes" matrix (f32, resident)
    #   m_ref  : (N*Si, So_pad)   tile(pad(W^T), N)             (compute dtype, resident)
    #   o_ref  : (Bt, So_pad)     sigmoid(W @ y^T)^T, lane-dense padded (f32)
    x = x_ref[...].astype(jnp.float32)
    n_flat = n_ref[...]
    n_f32 = n_flat.astype(jnp.float32)

    # energy[b, j] = a1.(W x_b) + a2.(W n_view_b[:, j])   (GAT attention logits)
    s = jnp.sum(x * u1_ref[...], axis=1, keepdims=True)                       # (Bt, 1)
    t = jnp.dot(n_flat, u2m_ref[...], preferred_element_type=jnp.float32)     # (Bt, N)
    energy = s + t                                                            # (Bt, N)

    # row softmax over the neighbour axis (exact divide, f32)
    m = jnp.max(energy, axis=1, keepdims=True)
    p = jnp.exp(energy - m)
    alpha = p / jnp.sum(p, axis=1, keepdims=True)                             # (Bt, N)

    # aggregation + output projection folded into one lane-dense MXU matmul:
    #   y_b   = alpha_b @ n_x_b                      (1, Si)
    #   out_b = sigmoid(W @ y_b^T)                   == sigmoid(prod_b @ M)[:So]
    alpha_e = jnp.dot(alpha, e_ref[...], preferred_element_type=jnp.float32)  # (Bt, N*Si)
    prod = (alpha_e * n_f32).astype(m_ref.dtype)                              # (Bt, N*Si)
    out = jnp.dot(prod, m_ref[...], preferred_element_type=jnp.float32)       # (Bt, So_pad)
    o_ref[...] = jax.nn.sigmoid(out).astype(o_ref.dtype)


def prepare_gat_params(W, a, num_neighbors, compute_dtype=jnp.float32):
    """Hoisted parameter-only precompute (once per parameter update, NOT per forward)."""
    W = W.astype(jnp.float32)
    a = a.astype(jnp.float32)
    size_out, size_in = W.shape
    N = int(num_neighbors)

    a1 = a[:size_out, 0]
    a2 = a[size_out:, 0]
    u1 = (a1 @ W).reshape(1, size_in)                                   # (1, Si)
    u2 = a2 @ W                                                         # (Si,)

    # U2[i*N + n, n] = u2[i]  ->  (n_flat @ U2)[b, n] == a2.(W @ n_view_b)[:, n]
    U2 = jnp.kron(u2.reshape(size_in, 1), jnp.eye(N, dtype=jnp.float32))        # (N*Si, N)
    # E[n, n*Si + i] = 1      ->  alpha @ E broadcasts alpha[b, n] over node-n lanes
    E = jnp.kron(jnp.eye(N, dtype=jnp.float32), jnp.ones((1, size_in), jnp.float32))  # (N, N*Si)

    size_out_pad = ((size_out + 127) // 128) * 128                      # lane-dense output slab
    Wt_pad = jnp.zeros((size_in, size_out_pad), jnp.float32).at[:, :size_out].set(W.T)
    # M[n*Si + i, o] = W^T[i, o]  ->  prod @ M == (alpha @ n_x) @ W^T  (padded to 128 lanes)
    M = jnp.tile(Wt_pad, (N, 1))                                         # (N*Si, So_pad)

    return {
        "size_in": size_in,
        "size_out": size_out,
        "size_out_pad": size_out_pad,
        "num_neighbors": N,
        "compute_dtype": compute_dtype,
        "u1": u1,                              # f32 (tiny)
        "U2": U2.astype(compute_dtype),
        "E": E,                                # f32 (0/1, tiny)
        "M": M.astype(compute_dtype),
    }


def gat_attention_batched(params, x_batch, n_x_batch, *, block_nodes=256):
    """Batched AttentionMechanism.forward over B nodes -> (B, size_out)."""
    Si = params["size_in"]
    So = params["size_out"]
    So_pad = params["size_out_pad"]
    N = params["num_neighbors"]
    cd = params["compute_dtype"]
    B = x_batch.shape[0]

    xb = x_batch.reshape(B, Si).astype(cd)            # (B, Si)
    nb = n_x_batch.reshape(B, N * Si).astype(cd)      # raw flatten == torch .view semantics

    Bt = min(block_nodes, B)
    pad = (-B) % Bt
    if pad:
        xb = jnp.pad(xb, ((0, pad), (0, 0)))
        nb = jnp.pad(nb, ((0, pad), (0, 0)))
    Bp = B + pad

    grid_spec = pltpu.PrefetchScalarGridSpec(
        num_scalar_prefetch=0,
        grid=(Bp // Bt,),
        in_specs=[
            pl.BlockSpec((Bt, Si), lambda i: (i, 0)),            # streamed per node block
            pl.BlockSpec((Bt, N * Si), lambda i: (i, 0)),        # streamed per node block
            pl.BlockSpec((1, Si), lambda i: (0, 0)),             # resident param
            pl.BlockSpec((N * Si, N), lambda i: (0, 0)),         # resident param
            pl.BlockSpec((N, N * Si), lambda i: (0, 0)),         # resident param
            pl.BlockSpec((N * Si, So_pad), lambda i: (0, 0)),    # resident param
        ],
        out_specs=pl.BlockSpec((Bt, So_pad), lambda i: (i, 0)),
    )
    out = pl.pallas_call(
        gat_batched_kernel,
        out_shape=jax.ShapeDtypeStruct((Bp, So_pad), jnp.float32),
        grid_spec=grid_spec,
        compiler_params=pltpu.CompilerParams(dimension_semantics=("parallel",)),
    )(xb, nb, params["u1"], params["U2"], params["E"], params["M"])

    return out[:B, :So]


def attention_mechanism(params, x, n_x):
    """Single-node API matching AttentionMechanism.forward(x, n_x) -> (size_out, 1)."""
    So = params["size_out"]
    out = gat_attention_batched(params, x.reshape(1, -1), n_x.reshape(1, -1), block_nodes=1)
    return out.reshape(So, 1)


def xavier_uniform(key, shape):
    # torch.nn.init.xavier_uniform_ for 2-D: fan_in = shape[1], fan_out = shape[0]
    fan_out, fan_in = shape
    bound = (6.0 / (fan_in + fan_out)) ** 0.5
    return jax.random.uniform(key, shape, jnp.float32, -bound, bound)


def _reference_single(x, n_x, W, a):
    """Faithful jnp transcription of the PyTorch forward for ONE node."""
    size_out, size_in = W.shape
    xr = x.reshape(size_in, 1)
    nr = n_x.reshape(size_in, -1)            # torch .view quirk: raw reinterpretation
    Wx = W @ xr
    Wn = W @ nr
    cat = jnp.concatenate([jnp.tile(Wx, (1, Wn.shape[1])), Wn], axis=0)
    energy = a.T @ cat                       # (1, N)
    alpha = jax.nn.softmax(energy, axis=1)
    y = (alpha @ n_x).T                      # (Si, 1) -- aggregation uses original layout
    return jax.nn.sigmoid(W @ y)             # (So, 1)


if __name__ == "__main__":
    size_in, size_out, N, B = 16, 32, 8, 1024

    key = jax.random.PRNGKey(0)
    k1, k2, k3, k4 = jax.random.split(key, 4)
    W = xavier_uniform(k1, (size_out, size_in))               # (32, 16)
    a = xavier_uniform(k2, (2 * size_out, 1))                 # (64, 1)
    x = jax.random.normal(k3, (B, size_in), jnp.float32)      # B nodes
    n_x = jax.random.normal(k4, (B, N, size_in), jnp.float32) # B x N neighbours

    # reference (PyTorch-faithful), vmapped over nodes
    ref = jax.vmap(lambda xx, nn: _reference_single(xx, nn, W, a))(x, n_x)  # (B, So, 1)
    ref = ref[:, :, 0]

    # ---- f32 path (default) ----
    params_f32 = prepare_gat_params(W, a, N, compute_dtype=jnp.float32)
    out = gat_attention_batched(params_f32, x, n_x, block_nodes=256)
    out = jax.block_until_ready(out)
    assert out.shape == (B, size_out)
    assert jnp.allclose(out, ref, atol=5e-3, rtol=5e-3), "batched f32 mismatch vs reference"

    # ---- single-node module-signature path ----
    out1 = jax.block_until_ready(attention_mechanism(params_f32, x[0], n_x[0]))
    assert out1.shape == (size_out, 1)
    assert jnp.allclose(out1, ref[0].reshape(size_out, 1), atol=5e-3, rtol=5e-3), \
        "single-node mismatch vs reference"

    # ---- bf16 MXU-operand path (v6e / v7x): streamed inputs + matmul params in bf16 ----
    params_bf16 = prepare_gat_params(W, a, N, compute_dtype=jnp.bfloat16)
    out_bf = jax.block_until_ready(gat_attention_batched(params_bf16, x, n_x, block_nodes=256))
    assert jnp.allclose(out_bf, ref, atol=5e-2, rtol=5e-2), "bf16 path drifted too far"

    print("KERNEL_OK")
</pallas_src>

<mosaic_0001>
module attributes {stable_mosaic.version = 11 : i64} {
  func.func @gat_batched_kernel(%arg0: i32, %arg1: memref<256x16xf32, #tpu.memory_space<vmem>>, %arg2: memref<256x128xf32, #tpu.memory_space<vmem>>, %arg3: memref<1x16xf32, #tpu.memory_space<vmem>>, %arg4: memref<128x8xf32, #tpu.memory_space<vmem>>, %arg5: memref<8x128xf32, #tpu.memory_space<vmem>>, %arg6: memref<128x128xf32, #tpu.memory_space<vmem>>, %arg7: memref<256x128xf32, #tpu.memory_space<vmem>>) attributes {dimension_semantics = [#tpu.dimension_semantics<parallel>], iteration_bounds = array<i64: 4>, scalar_prefetch = 0 : i64, scratch_operands = 0 : i64, tpu.core_type = #tpu.core_type<tc>, window_params = [{transform_indices = @transform_0, window_bounds = array<i64: 256, 16>}, {transform_indices = @transform_1, window_bounds = array<i64: 256, 128>}, {pipeline_mode = #tpu.pipeline_mode<synchronous>, transform_indices = @transform_2, window_bounds = array<i64: 1, 16>}, {pipeline_mode = #tpu.pipeline_mode<synchronous>, transform_indices = @transform_3, window_bounds = array<i64: 128, 8>}, {pipeline_mode = #tpu.pipeline_mode<synchronous>, transform_indices = @transform_4, window_bounds = array<i64: 8, 128>}, {pipeline_mode = #tpu.pipeline_mode<synchronous>, transform_indices = @transform_5, window_bounds = array<i64: 128, 128>}, {transform_indices = @transform_6, window_bounds = array<i64: 256, 128>}]} {
    %c0 = arith.constant 0 : index
    %c0_0 = arith.constant 0 : index
    %0 = vector.load %arg1[%c0, %c0_0] : memref<256x16xf32, #tpu.memory_space<vmem>>, vector<256x16xf32>
    %c0_1 = arith.constant 0 : index
    %c0_2 = arith.constant 0 : index
    %1 = vector.load %arg2[%c0_1, %c0_2] : memref<256x128xf32, #tpu.memory_space<vmem>>, vector<256x128xf32>
    %c0_3 = arith.constant 0 : index
    %c0_4 = arith.constant 0 : index
    %2 = vector.load %arg3[%c0_3, %c0_4] : memref<1x16xf32, #tpu.memory_space<vmem>>, vector<1x16xf32>
    %3 = vector.broadcast %2 : vector<1x16xf32> to vector<256x16xf32>
    %4 = arith.mulf %0, %3 : vector<256x16xf32>
    %cst = arith.constant dense<0.000000e+00> : vector<256xf32>
    %5 = vector.multi_reduction <add>, %4, %cst [1] : vector<256x16xf32> to vector<256xf32>
    %6 = vector.shape_cast %5 : vector<256xf32> to vector<256x1xf32>
    %c0_5 = arith.constant 0 : index
    %c0_6 = arith.constant 0 : index
    %7 = vector.load %arg4[%c0_5, %c0_6] : memref<128x8xf32, #tpu.memory_space<vmem>>, vector<128x8xf32>
    %cst_7 = arith.constant dense<0.000000e+00> : vector<256x8xf32>
    %8 = tpu.matmul %1, %7, %cst_7 {dimension_numbers = #tpu.dot_dimension_numbers<[1], [0], [0], [1], [0, 0, 1, 1], [], []>} : vector<256x128xf32>, vector<128x8xf32>, vector<256x8xf32> -> vector<256x8xf32>
    %9 = vector.broadcast %6 : vector<256x1xf32> to vector<256x8xf32>
    %10 = arith.addf %9, %8 : vector<256x8xf32>
    %cst_8 = arith.constant dense<0xFF800000> : vector<256xf32>
    %11 = vector.multi_reduction <maximumf>, %10, %cst_8 [1] : vector<256x8xf32> to vector<256xf32>
    %12 = vector.shape_cast %11 : vector<256xf32> to vector<256x1xf32>
    %13 = vector.broadcast %12 : vector<256x1xf32> to vector<256x8xf32>
    %14 = arith.subf %10, %13 : vector<256x8xf32>
    %15 = math.exp %14 : vector<256x8xf32>
    %cst_9 = arith.constant dense<0.000000e+00> : vector<256xf32>
    %16 = vector.multi_reduction <add>, %15, %cst_9 [1] : vector<256x8xf32> to vector<256xf32>
    %17 = vector.shape_cast %16 : vector<256xf32> to vector<256x1xf32>
    %18 = vector.broadcast %17 : vector<256x1xf32> to vector<256x8xf32>
    %19 = arith.divf %15, %18 : vector<256x8xf32>
    %c0_10 = arith.constant 0 : index
    %c0_11 = arith.constant 0 : index
    %20 = vector.load %arg5[%c0_10, %c0_11] : memref<8x128xf32, #tpu.memory_space<vmem>>, vector<8x128xf32>
    %cst_12 = arith.constant dense<0.000000e+00> : vector<256x128xf32>
    %21 = tpu.matmul %19, %20, %cst_12 {dimension_numbers = #tpu.dot_dimension_numbers<[1], [0], [0], [1], [0, 0, 1, 1], [], []>} : vector<256x8xf32>, vector<8x128xf32>, vector<256x128xf32> -> vector<256x128xf32>
    %22 = arith.mulf %21, %1 : vector<256x128xf32>
    %c0_13 = arith.constant 0 : index
    %c0_14 = arith.constant 0 : index
    %23 = vector.load %arg6[%c0_13, %c0_14] : memref<128x128xf32, #tpu.memory_space<vmem>>, vector<128x128xf32>
    %cst_15 = arith.constant dense<0.000000e+00> : vector<256x128xf32>
    %24 = tpu.matmul %22, %23, %cst_15 {dimension_numbers = #tpu.dot_dimension_numbers<[1], [0], [0], [1], [0, 0, 1, 1], [], []>} : vector<256x128xf32>, vector<128x128xf32>, vector<256x128xf32> -> vector<256x128xf32>
    %25 = arith.negf %24 : vector<256x128xf32>
    %26 = math.exp %25 : vector<256x128xf32>
    %cst_16 = arith.constant 1.000000e+00 : f32
    %27 = vector.broadcast %cst_16 : f32 to vector<256x128xf32>
    %28 = arith.addf %27, %26 : vector<256x128xf32>
    %29 = arith.divf %27, %28 : vector<256x128xf32>
    %c0_17 = arith.constant 0 : index
    %c0_18 = arith.constant 0 : index
    %30 = vector.load %arg7[%c0_17, %c0_18] : memref<256x128xf32, #tpu.memory_space<vmem>>, vector<256x128xf32>
    tpu.vector_store %arg7[%c0_17, %c0_18], %29 {strides = array<i32>} : memref<256x128xf32, #tpu.memory_space<vmem>>, vector<256x128xf32>,
    return
  }
  func.func @transform_0(%arg0: i32) -> (i32, i32) {
    %c0_i32 = arith.constant 0 : i32
    %c0_i32_0 = arith.constant 0 : i32
    return %arg0, %c0_i32 : i32, i32
  }
  func.func @transform_1(%arg0: i32) -> (i32, i32) {
    %c0_i32 = arith.constant 0 : i32
    %c0_i32_0 = arith.constant 0 : i32
    return %arg0, %c0_i32 : i32, i32
  }
  func.func @transform_2(%arg0: i32) -> (i32, i32) {
    %c0_i32 = arith.constant 0 : i32
    %c0_i32_0 = arith.constant 0 : i32
    %c0_i32_1 = arith.constant 0 : i32
    return %c0_i32, %c0_i32_0 : i32, i32
  }
  func.func @transform_3(%arg0: i32) -> (i32, i32) {
    %c0_i32 = arith.constant 0 : i32
    %c0_i32_0 = arith.constant 0 : i32
    %c0_i32_1 = arith.constant 0 : i32
    return %c0_i32, %c0_i32_0 : i32, i32
  }
  func.func @transform_4(%arg0: i32) -> (i32, i32) {
    %c0_i32 = arith.constant 0 : i32
    %c0_i32_0 = arith.constant 0 : i32
    %c0_i32_1 = arith.constant 0 : i32
    return %c0_i32, %c0_i32_0 : i32, i32
  }
  func.func @transform_5(%arg0: i32) -> (i32, i32) {
    %c0_i32 = arith.constant 0 : i32
    %c0_i32_0 = arith.constant 0 : i32
    %c0_i32_1 = arith.constant 0 : i32
    return %c0_i32, %c0_i32_0 : i32, i32
  }
  func.func @transform_6(%arg0: i32) -> (i32, i32) {
    %c0_i32 = arith.constant 0 : i32
    %c0_i32_0 = arith.constant 0 : i32
    return %arg0, %c0_i32 : i32, i32
  }
}

</mosaic_0001>

<llo_original>
// kernel: tpu_custom_call.1
$region0: #{tpu_custom_call.1}
  #allocation0 [shape = 'u32[]', space=smem, size = 0x4, offset = 0x4, fixed_abs, tag = 'smem constant byte address 0x4 - core index']
  #allocation1 [shape = 'u32[144,128]{1,0:T(1,128)}', space=vmem, size = 0x12000, scoped, tag = 'internal scratch']
  %s0 = inlined_call_operand.vmem [shape: f32[1024,16], index: 0, kind: input, shape index: {}]
  %s1 = inlined_call_operand.vmem [shape: f32[1024,128], index: 1, kind: input, shape index: {}]
  %s2 = inlined_call_operand.vmem [shape: f32[1,16], index: 2, kind: input, shape index: {}]
  %s3 = inlined_call_operand.vmem [shape: f32[128,8], index: 3, kind: input, shape index: {}]
  %s4 = inlined_call_operand.vmem [shape: f32[8,128], index: 4, kind: input, shape index: {}]
  %s5 = inlined_call_operand.vmem [shape: f32[128,128], index: 5, kind: input, shape index: {}]
  %s6 = inlined_call_operand.hbm [shape: f32[1024,128], index: 6, kind: output, shape index: {}]
  %s7 = sld [smem:[#allocation0]]
  $region57: #{tpu_custom_call.1} parent=0
    _
  %s9 = ssub.s32 1, %s7
  %s10 = scalar_select 0, %s9, %s7
  $region1: #{tpu_custom_call.1} parent=0
    #allocation2 [shape = 'u8[262144]{0}', space=vmem, size = 0x40000, scoped, tag = 'output window, operand 0']
    #allocation3 [shape = 's32[2]{0}', space=sflag, size = 0x8, scoped, tag = 'scoped memory for tpu_custom_call.1']
    %11 = vsyncpa [#allocation3], 0
    %s12 = scalar_lea.sflag [#allocation3], 1
    %13 = vsyncpa %s12, 0
    loop: start=0, step=1, limit=6
    $region2: #{tpu_custom_call.1} parent=1 // loop_pre_header
      _
    $region3: #{tpu_custom_call.1} parent=1 // loop_header
      %s15 = sphi 0, %s19
      %p16 = scmp.ge.s32.totalorder %s15, 6
      %s25 = sphi 0, %s27
      %s28 = sphi 0, %s25
      %s29 = sphi 0, %s28
      %s45 = sphi 0, %s29
      %s51 = sphi 0, %s53
      %s54 = sphi 0, %s51
      %s55 = sphi 0, %s54
      %s71 = sphi 0, %s55
      %s75 = sphi 0, %s75
      %s77 = sphi 0, %s75
      %s78 = sphi 0, %s77
      %s92 = sphi 0, %s78
      %s96 = sphi 0, %s96
      %s98 = sphi 0, %s96
      %s99 = sphi 0, %s98
      %s113 = sphi 0, %s99
      %s117 = sphi 0, %s117
      %s119 = sphi 0, %s117
      %s120 = sphi 0, %s119
      %s134 = sphi 0, %s120
      %s138 = sphi 0, %s138
      %s140 = sphi 0, %s138
      %s141 = sphi 0, %s140
      %s155 = sphi 0, %s141
      %s161 = sphi 0, %s163
      %s164 = sphi 0, %s161
      %s165 = sphi 0, %s164
      %s181 = sphi 0, %s165
    $region4: #{tpu_custom_call.1} parent=1 // loop_header_branch
      %18 = sbr.rel (%p16) target = $region8
    $region5: #{tpu_custom_call.1} parent=1 // loop_body
      %s20 = ssub.s32 %s15, 1
      %s21 = ssub.s32 %s15, 2
      %s22 = sadd.s32 %s15, 1
      %s23 = ssub.s32 %s15, %s22
      %p24 = scmp.eq.s32.totalorder %s23, 0
      %s26 = sadd.s32 %s25, 1
      %s27 = scalar_select %p24, %s25, %s26
      %p30 = pneg %p24
      %p31 = scmp.eq.s32.totalorder %s15, 3
      %p32 = por %p30, %p31
      %p33 = scmp.ne.s32.totalorder %s25, %s28
      %p34 = scmp.eq.s32.totalorder %s15, 0
      %p35 = por %p33, %p34
      %p36 = scmp.ne.s32.totalorder %s25, %s28
      %p37 = scmp.eq.s32.totalorder %s20, 3
      %p38 = por %p36, %p37
      %p39 = scmp.ne.s32.totalorder %s28, %s29
      %p40 = scmp.eq.s32.totalorder %s20, 0
      %p41 = por %p39, %p40
      %p42 = scmp.ne.s32.totalorder %s28, %s29
      %p43 = scmp.eq.s32.totalorder %s21, 3
      %p44 = por %p42, %p43
      %p46 = scmp.ne.s32.totalorder %s29, %s45
      %p47 = scmp.eq.s32.totalorder %s21, 0
      %p48 = por %p46, %p47
      %s49 = ssub.s32 %s15, %s22
      %p50 = scmp.eq.s32.totalorder %s49, 0
      %s52 = sadd.s32 %s51, 1
      %s53 = scalar_select %p50, %s51, %s52
      %p56 = pneg %p50
      %p57 = scmp.eq.s32.totalorder %s15, 3
      %p58 = por %p56, %p57
      %p59 = scmp.ne.s32.totalorder %s51, %s54
      %p60 = scmp.eq.s32.totalorder %s15, 0
      %p61 = por %p59, %p60
      %p62 = scmp.ne.s32.totalorder %s51, %s54
      %p63 = scmp.eq.s32.totalorder %s20, 3
      %p64 = por %p62, %p63
      %p65 = scmp.ne.s32.totalorder %s54, %s55
      %p66 = scmp.eq.s32.totalorder %s20, 0
      %p67 = por %p65, %p66
      %p68 = scmp.ne.s32.totalorder %s54, %s55
      %p69 = scmp.eq.s32.totalorder %s21, 3
      %p70 = por %p68, %p69
      %p72 = scmp.ne.s32.totalorder %s55, %s71
      %p73 = scmp.eq.s32.totalorder %s21, 0
      %p74 = por %p72, %p73
      %s76 = sadd.s32 %s75, 1
      %p79 = scmp.eq.s32.totalorder %s15, 3
      %p80 = scmp.ne.s32.totalorder %s75, %s77
      %p81 = scmp.eq.s32.totalorder %s15, 0
      %p82 = por %p80, %p81
      %p83 = scmp.ne.s32.totalorder %s75, %s77
      %p84 = scmp.eq.s32.totalorder %s20, 3
      %p85 = por %p83, %p84
      %p86 = scmp.ne.s32.totalorder %s77, %s78
      %p87 = scmp.eq.s32.totalorder %s20, 0
      %p88 = por %p86, %p87
      %p89 = scmp.ne.s32.totalorder %s77, %s78
      %p90 = scmp.eq.s32.totalorder %s21, 3
      %p91 = por %p89, %p90
      %p93 = scmp.ne.s32.totalorder %s78, %s92
      %p94 = scmp.eq.s32.totalorder %s21, 0
      %p95 = por %p93, %p94
      %s97 = sadd.s32 %s96, 1
      %p100 = scmp.eq.s32.totalorder %s15, 3
      %p101 = scmp.ne.s32.totalorder %s96, %s98
      %p102 = scmp.eq.s32.totalorder %s15, 0
      %p103 = por %p101, %p102
      %p104 = scmp.ne.s32.totalorder %s96, %s98
      %p105 = scmp.eq.s32.totalorder %s20, 3
      %p106 = por %p104, %p105
      %p107 = scmp.ne.s32.totalorder %s98, %s99
      %p108 = scmp.eq.s32.totalorder %s20, 0
      %p109 = por %p107, %p108
      %p110 = scmp.ne.s32.totalorder %s98, %s99
      %p111 = scmp.eq.s32.totalorder %s21, 3
      %p112 = por %p110, %p111
      %p114 = scmp.ne.s32.totalorder %s99, %s113
      %p115 = scmp.eq.s32.totalorder %s21, 0
      %p116 = por %p114, %p115
      %s118 = sadd.s32 %s117, 1
      %p121 = scmp.eq.s32.totalorder %s15, 3
      %p122 = scmp.ne.s32.totalorder %s117, %s119
      %p123 = scmp.eq.s32.totalorder %s15, 0
      %p124 = por %p122, %p123
      %p125 = scmp.ne.s32.totalorder %s117, %s119
      %p126 = scmp.eq.s32.totalorder %s20, 3
      %p127 = por %p125, %p126
      %p128 = scmp.ne.s32.totalorder %s119, %s120
      %p129 = scmp.eq.s32.totalorder %s20, 0
      %p130 = por %p128, %p129
      %p131 = scmp.ne.s32.totalorder %s119, %s120
      %p132 = scmp.eq.s32.totalorder %s21, 3
      %p133 = por %p131, %p132
      %p135 = scmp.ne.s32.totalorder %s120, %s134
      %p136 = scmp.eq.s32.totalorder %s21, 0
      %p137 = por %p135, %p136
      %s139 = sadd.s32 %s138, 1
      %p142 = scmp.eq.s32.totalorder %s15, 3
      %p143 = scmp.ne.s32.totalorder %s138, %s140
      %p144 = scmp.eq.s32.totalorder %s15, 0
      %p145 = por %p143, %p144
      %p146 = scmp.ne.s32.totalorder %s138, %s140
      %p147 = scmp.eq.s32.totalorder %s20, 3
      %p148 = por %p146, %p147
      %p149 = scmp.ne.s32.totalorder %s140, %s141
      %p150 = scmp.eq.s32.totalorder %s20, 0
      %p151 = por %p149, %p150
      %p152 = scmp.ne.s32.totalorder %s140, %s141
      %p153 = scmp.eq.s32.totalorder %s21, 3
      %p154 = por %p152, %p153
      %p156 = scmp.ne.s32.totalorder %s141, %s155
      %p157 = scmp.eq.s32.totalorder %s21, 0
      %p158 = por %p156, %p157
      %s159 = ssub.s32 %s15, %s22
      %p160 = scmp.eq.s32.totalorder %s159, 0
      %s162 = sadd.s32 %s161, 1
      %s163 = scalar_select %p160, %s161, %s162
      %p166 = pneg %p160
      %p167 = scmp.eq.s32.totalorder %s15, 3
      %p168 = por %p166, %p167
      %p169 = scmp.ne.s32.totalorder %s161, %s164
      %p170 = scmp.eq.s32.totalorder %s15, 0
      %p171 = por %p169, %p170
      %p172 = scmp.ne.s32.totalorder %s161, %s164
      %p173 = scmp.eq.s32.totalorder %s20, 3
      %p174 = por %p172, %p173
      %p175 = scmp.ne.s32.totalorder %s164, %s165
      %p176 = scmp.eq.s32.totalorder %s20, 0
      %p177 = por %p175, %p176
      %p178 = scmp.ne.s32.totalorder %s164, %s165
      %p179 = scmp.eq.s32.totalorder %s21, 3
      %p180 = por %p178, %p179
      %p182 = scmp.ne.s32.totalorder %s165, %s181
      %p183 = scmp.eq.s32.totalorder %s21, 0
      %p184 = por %p182, %p183
      %p185 = scmp.le.s32.totalorder 1, %s15
      %p186 = scmp.lt.s32.totalorder %s15, 5
      %p187 = pnand %p185, %p186
      %p188 = pneg %p187
      // Predicated region
      $region9: #{tpu_custom_call.1} parent=5 // pred_check
        _
      $region10: #{tpu_custom_call.1} parent=5 // pred_check_branch
        %190 = sbr.rel (%p187) target = $region12
      $region11: #{tpu_custom_call.1} parent=5 // pred_region
        %s191 = ssub.s32 %s15, 1
        // Predicated region
        $region13: #{tpu_custom_call.1} parent=11 // pred_check
          %p192 = pneg %p88
        $region14: #{tpu_custom_call.1} parent=11 // pred_check_branch
          %194 = sbr.rel (%p192) target = $region16
        $region15: #{tpu_custom_call.1} parent=11 // pred_region
          _
        $region16: #{tpu_custom_call.1} parent=11 // pred_fallthru
          _
        // Predicated region
        $region17: #{tpu_custom_call.1} parent=11 // pred_check
          %p195 = pneg %p109
        $region18: #{tpu_custom_call.1} parent=11 // pred_check_branch
          %197 = sbr.rel (%p195) target = $region20
        $region19: #{tpu_custom_call.1} parent=11 // pred_region
          _
        $region20: #{tpu_custom_call.1} parent=11 // pred_fallthru
          _
        // Predicated region
        $region21: #{tpu_custom_call.1} parent=11 // pred_check
          %p198 = pneg %p130
        $region22: #{tpu_custom_call.1} parent=11 // pred_check_branch
          %200 = sbr.rel (%p198) target = $region24
        $region23: #{tpu_custom_call.1} parent=11 // pred_region
          _
        $region24: #{tpu_custom_call.1} parent=11 // pred_fallthru
          _
        // Predicated region
        $region25: #{tpu_custom_call.1} parent=11 // pred_check
          %p201 = pneg %p151
        $region26: #{tpu_custom_call.1} parent=11 // pred_check_branch
          %203 = sbr.rel (%p201) target = $region28
        $region27: #{tpu_custom_call.1} parent=11 // pred_region
          _
        $region28: #{tpu_custom_call.1} parent=11 // pred_fallthru
          _
      $region12: #{tpu_custom_call.1} parent=5 // pred_fallthru
        _
      %p204 = scmp.lt.s32.totalorder %s15, 4
      // Predicated region
      $region29: #{tpu_custom_call.1} parent=5 // pred_check
        %p205 = pneg %p204
      $region30: #{tpu_custom_call.1} parent=5 // pred_check_branch
        %207 = sbr.rel (%p205) target = $region32
      $region31: #{tpu_custom_call.1} parent=5 // pred_region
        // Predicated region
        $region33: #{tpu_custom_call.1} parent=31 // pred_check
          %p208 = pneg %p35
        $region34: #{tpu_custom_call.1} parent=31 // pred_check_branch
          %210 = sbr.rel (%p208) target = $region36
        $region35: #{tpu_custom_call.1} parent=31 // pred_region
          %s211 = smul.u32 32, %s15
          %p212 = scmp.lt.s32.totalorder %s211, 127
          %s213 = scalar_select %p212, %s211, 127
          %s214 = smul.addr %s213, 8
          %s215 = scalar_lea.vmem %s0, %s214
          %s216 = smul.u32 32, %s15
        $region36: #{tpu_custom_call.1} parent=31 // pred_fallthru
          _
        // Predicated region
        $region37: #{tpu_custom_call.1} parent=31 // pred_check
          %p217 = pneg %p61
        $region38: #{tpu_custom_call.1} parent=31 // pred_check_branch
          %219 = sbr.rel (%p217) target = $region40
        $region39: #{tpu_custom_call.1} parent=31 // pred_region
          %s220 = smul.u32 32, %s15
          %p221 = scmp.lt.s32.totalorder %s220, 127
          %s222 = scalar_select %p221, %s220, 127
          %s223 = smul.addr %s222, 8
          %s224 = scalar_lea.vmem %s1, %s223
          %s225 = smul.u32 32, %s15
        $region40: #{tpu_custom_call.1} parent=31 // pred_fallthru
          _
      $region32: #{tpu_custom_call.1} parent=5 // pred_fallthru
        _
      %p226 = scmp.le.s32.totalorder 1, %s15
      %p227 = scmp.lt.s32.totalorder %s15, 5
      %p228 = pnand %p226, %p227
      %p229 = pneg %p228
      // Predicated region
      $region41: #{tpu_custom_call.1} parent=5 // pred_check
        _
      $region42: #{tpu_custom_call.1} parent=5 // pred_check_branch
        %231 = sbr.rel (%p228) target = $region44
      $region43: #{tpu_custom_call.1} parent=5 // pred_region
        %s232 = ssub.s32 %s15, 1
        %s233 = smul.u32 32, %s20
        %p234 = scmp.lt.s32.totalorder %s233, 127
        %s235 = scalar_select %p234, %s233, 127
        %s236 = smul.addr %s235, 8
        %s237 = scalar_lea.vmem %s0, %s236
        %p238 = pneg %p41
        %p239 = pneg %p38
        %s240 = smul.u32 32, %s20
        %p241 = scmp.lt.s32.totalorder %s240, 127
        %s242 = scalar_select %p241, %s240, 127
        %s243 = smul.addr %s242, 8
        %s244 = scalar_lea.vmem %s1, %s243
        %p245 = pneg %p67
        %p246 = pneg %p64
        %p247 = pneg %p88
        %p248 = pneg %p85
        %p249 = pneg %p109
        %p250 = pneg %p106
        %p251 = pneg %p130
        %p252 = pneg %p127
        %p253 = pneg %p151
        %p254 = pneg %p148
        %p255 = pneg %p177
        %p256 = pneg %p174
        %s257 = sand.u32 %s164, 1
        %s258 = scalar_lea.sflag [#allocation3], %s257
        %s259 = sand.u32 %s164, 1
        %s260 = smul.addr %s259, 256
        %s261 = scalar_lea.vmem [#allocation2], %s260
        %s262 = smul.u32 32, %s20
        %p263 = scmp.lt.s32.totalorder %s262, 127
        %s264 = scalar_select %p263, %s262, 127
        %s265 = smul.addr %s264, 8
        %s266 = scalar_lea.vmem %s0, %s265
        %s267 = smul.u32 32, %s20
        %s268 = smul.u32 32, %s20
        %p269 = scmp.lt.s32.totalorder %s268, 127
        %s270 = scalar_select %p269, %s268, 127
        %s271 = smul.addr %s270, 8
        %s272 = scalar_lea.vmem %s1, %s271
        %s273 = smul.u32 32, %s20
        %s274 = smul.u32 32, %s20
        %v275 = vld [vmem:[%s266] sm:$0xff]
        %v276 = vld [vmem:[%s266 + $0x8] sm:$0xff]
        %v277 = vld [vmem:[%s266 + $0x10] sm:$0xff]
        %v278 = vld [vmem:[%s266 + $0x18] sm:$0xff]
        %v279 = vld [vmem:[%s266 + $0x20] sm:$0xff]
        %v280 = vld [vmem:[%s266 + $0x28] sm:$0xff]
        %v281 = vld [vmem:[%s266 + $0x30] sm:$0xff]
        %v282 = vld [vmem:[%s266 + $0x38] sm:$0xff]
        %v283 = vld [vmem:[%s266 + $0x40] sm:$0xff]
        %v284 = vld [vmem:[%s266 + $0x48] sm:$0xff]
        %v285 = vld [vmem:[%s266 + $0x50] sm:$0xff]
        %v286 = vld [vmem:[%s266 + $0x58] sm:$0xff]
        %v287 = vld [vmem:[%s266 + $0x60] sm:$0xff]
        %v288 = vld [vmem:[%s266 + $0x68] sm:$0xff]
        %v289 = vld [vmem:[%s266 + $0x70] sm:$0xff]
        %v290 = vld [vmem:[%s266 + $0x78] sm:$0xff]
        %v291 = vld [vmem:[%s266 + $0x80] sm:$0xff]
        %v292 = vld [vmem:[%s266 + $0x88] sm:$0xff]
        %v293 = vld [vmem:[%s266 + $0x90] sm:$0xff]
        %v294 = vld [vmem:[%s266 + $0x98] sm:$0xff]
        %v295 = vld [vmem:[%s266 + $0xa0] sm:$0xff]
        %v296 = vld [vmem:[%s266 + $0xa8] sm:$0xff]
        %v297 = vld [vmem:[%s266 + $0xb0] sm:$0xff]
        %v298 = vld [vmem:[%s266 + $0xb8] sm:$0xff]
        %v299 = vld [vmem:[%s266 + $0xc0] sm:$0xff]
        %v300 = vld [vmem:[%s266 + $0xc8] sm:$0xff]
        %v301 = vld [vmem:[%s266 + $0xd0] sm:$0xff]
        %v302 = vld [vmem:[%s266 + $0xd8] sm:$0xff]
        %v303 = vld [vmem:[%s266 + $0xe0] sm:$0xff]
        %v304 = vld [vmem:[%s266 + $0xe8] sm:$0xff]
        %v305 = vld [vmem:[%s266 + $0xf0] sm:$0xff]
        %v306 = vld [vmem:[%s266 + $0xf8] sm:$0xff]
        %v307 = vld [vmem:[%s272] sm:$0xff]
        %v308 = vld [vmem:[%s272 + $0x8] sm:$0xff]
        %v309 = vld [vmem:[%s272 + $0x10] sm:$0xff]
        %v310 = vld [vmem:[%s272 + $0x18] sm:$0xff]
        %v311 = vld [vmem:[%s272 + $0x20] sm:$0xff]
        %v312 = vld [vmem:[%s272 + $0x28] sm:$0xff]
        %v313 = vld [vmem:[%s272 + $0x30] sm:$0xff]
        %v314 = vld [vmem:[%s272 + $0x38] sm:$0xff]
        %v315 = vld [vmem:[%s272 + $0x40] sm:$0xff]
        %v316 = vld [vmem:[%s272 + $0x48] sm:$0xff]
        %v317 = vld [vmem:[%s272 + $0x50] sm:$0xff]
        %v318 = vld [vmem:[%s272 + $0x58] sm:$0xff]
        %v319 = vld [vmem:[%s272 + $0x60] sm:$0xff]
        %v320 = vld [vmem:[%s272 + $0x68] sm:$0xff]
        %v321 = vld [vmem:[%s272 + $0x70] sm:$0xff]
        %v322 = vld [vmem:[%s272 + $0x78] sm:$0xff]
        %v323 = vld [vmem:[%s272 + $0x80] sm:$0xff]
        %v324 = vld [vmem:[%s272 + $0x88] sm:$0xff]
        %v325 = vld [vmem:[%s272 + $0x90] sm:$0xff]
        %v326 = vld [vmem:[%s272 + $0x98] sm:$0xff]
        %v327 = vld [vmem:[%s272 + $0xa0] sm:$0xff]
        %v328 = vld [vmem:[%s272 + $0xa8] sm:$0xff]
        %v329 = vld [vmem:[%s272 + $0xb0] sm:$0xff]
        %v330 = vld [vmem:[%s272 + $0xb8] sm:$0xff]
        %v331 = vld [vmem:[%s272 + $0xc0] sm:$0xff]
        %v332 = vld [vmem:[%s272 + $0xc8] sm:$0xff]
        %v333 = vld [vmem:[%s272 + $0xd0] sm:$0xff]
        %v334 = vld [vmem:[%s272 + $0xd8] sm:$0xff]
        %v335 = vld [vmem:[%s272 + $0xe0] sm:$0xff]
        %v336 = vld [vmem:[%s272 + $0xe8] sm:$0xff]
        %v337 = vld [vmem:[%s272 + $0xf0] sm:$0xff]
        %v338 = vld [vmem:[%s272 + $0xf8] sm:$0xff]
        %v339 = vld [vmem:[%s2] sm:$0x1]
        %v341 = vlaneseq
        %v342 = vshrl.u32 %v341, 7
        %v343 = vsub.s32 0, %v342
        %v344 = vrot.slane %v339, %v343
        %v346 = vmul.f32 %v275, %v344
        %v347 = vmul.f32 %v276, %v344
        %v348 = vmul.f32 %v277, %v344
        %v349 = vmul.f32 %v278, %v344
        %v350 = vmul.f32 %v279, %v344
        %v351 = vmul.f32 %v280, %v344
        %v352 = vmul.f32 %v281, %v344
        %v353 = vmul.f32 %v282, %v344
        %v354 = vmul.f32 %v283, %v344
        %v355 = vmul.f32 %v284, %v344
        %v356 = vmul.f32 %v285, %v344
        %v357 = vmul.f32 %v286, %v344
        %v358 = vmul.f32 %v287, %v344
        %v359 = vmul.f32 %v288, %v344
        %v360 = vmul.f32 %v289, %v344
        %v361 = vmul.f32 %v290, %v344
        %v362 = vmul.f32 %v291, %v344
        %v363 = vmul.f32 %v292, %v344
        %v364 = vmul.f32 %v293, %v344
        %v365 = vmul.f32 %v294, %v344
        %v366 = vmul.f32 %v295, %v344
        %v367 = vmul.f32 %v296, %v344
        %v368 = vmul.f32 %v297, %v344
        %v369 = vmul.f32 %v298, %v344
        %v370 = vmul.f32 %v299, %v344
        %v371 = vmul.f32 %v300, %v344
        %v372 = vmul.f32 %v301, %v344
        %v373 = vmul.f32 %v302, %v344
        %v374 = vmul.f32 %v303, %v344
        %v375 = vmul.f32 %v304, %v344
        %v376 = vmul.f32 %v305, %v344
        %v377 = vmul.f32 %v306, %v344
        %vm378 = vcmask 130048
        %v379 = vsel %vm378, %v346, 0.0
        %380 = vadd.xlane.f32.xlu0 %v379
        %v381 = vpop.xlane.xlu0 %380
        %v382 = vsel %vm378, %v347, 0.0
        %383 = vadd.xlane.f32.xlu0 %v382
        %v384 = vpop.xlane.xlu0 %383
        %v385 = vsel %vm378, %v348, 0.0
        %386 = vadd.xlane.f32.xlu0 %v385
        %v387 = vpop.xlane.xlu0 %386
        %v388 = vsel %vm378, %v349, 0.0
        %389 = vadd.xlane.f32.xlu0 %v388
        %v390 = vpop.xlane.xlu0 %389
        %v391 = vsel %vm378, %v350, 0.0
        %392 = vadd.xlane.f32.xlu0 %v391
        %v393 = vpop.xlane.xlu0 %392
        %v394 = vsel %vm378, %v351, 0.0
        %395 = vadd.xlane.f32.xlu0 %v394
        %v396 = vpop.xlane.xlu0 %395
        %v397 = vsel %vm378, %v352, 0.0
        %398 = vadd.xlane.f32.xlu0 %v397
        %v399 = vpop.xlane.xlu0 %398
        %v400 = vsel %vm378, %v353, 0.0
        %401 = vadd.xlane.f32.xlu0 %v400
        %v402 = vpop.xlane.xlu0 %401
        %v403 = vsel %vm378, %v354, 0.0
        %404 = vadd.xlane.f32.xlu0 %v403
        %v405 = vpop.xlane.xlu0 %404
        %v406 = vsel %vm378, %v355, 0.0
        %407 = vadd.xlane.f32.xlu0 %v406
        %v408 = vpop.xlane.xlu0 %407
        %v409 = vsel %vm378, %v356, 0.0
        %410 = vadd.xlane.f32.xlu0 %v409
        %v411 = vpop.xlane.xlu0 %410
        %v412 = vsel %vm378, %v357, 0.0
        %413 = vadd.xlane.f32.xlu0 %v412
        %v414 = vpop.xlane.xlu0 %413
        %v415 = vsel %vm378, %v358, 0.0
        %416 = vadd.xlane.f32.xlu0 %v415
        %v417 = vpop.xlane.xlu0 %416
        %v418 = vsel %vm378, %v359, 0.0
        %419 = vadd.xlane.f32.xlu0 %v418
        %v420 = vpop.xlane.xlu0 %419
        %v421 = vsel %vm378, %v360, 0.0
        %422 = vadd.xlane.f32.xlu0 %v421
        %v423 = vpop.xlane.xlu0 %422
        %v424 = vsel %vm378, %v361, 0.0
        %425 = vadd.xlane.f32.xlu0 %v424
        %v426 = vpop.xlane.xlu0 %425
        %v427 = vsel %vm378, %v362, 0.0
        %428 = vadd.xlane.f32.xlu0 %v427
        %v429 = vpop.xlane.xlu0 %428
        %v430 = vsel %vm378, %v363, 0.0
        %431 = vadd.xlane.f32.xlu0 %v430
        %v432 = vpop.xlane.xlu0 %431
        %v433 = vsel %vm378, %v364, 0.0
        %434 = vadd.xlane.f32.xlu0 %v433
        %v435 = vpop.xlane.xlu0 %434
        %v436 = vsel %vm378, %v365, 0.0
        %437 = vadd.xlane.f32.xlu0 %v436
        %v438 = vpop.xlane.xlu0 %437
        %v439 = vsel %vm378, %v366, 0.0
        %440 = vadd.xlane.f32.xlu0 %v439
        %v441 = vpop.xlane.xlu0 %440
        %v442 = vsel %vm378, %v367, 0.0
        %443 = vadd.xlane.f32.xlu0 %v442
        %v444 = vpop.xlane.xlu0 %443
        %v445 = vsel %vm378, %v368, 0.0
        %446 = vadd.xlane.f32.xlu0 %v445
        %v447 = vpop.xlane.xlu0 %446
        %v448 = vsel %vm378, %v369, 0.0
        %449 = vadd.xlane.f32.xlu0 %v448
        %v450 = vpop.xlane.xlu0 %449
        %v451 = vsel %vm378, %v370, 0.0
        %452 = vadd.xlane.f32.xlu0 %v451
        %v453 = vpop.xlane.xlu0 %452
        %v454 = vsel %vm378, %v371, 0.0
        %455 = vadd.xlane.f32.xlu0 %v454
        %v456 = vpop.xlane.xlu0 %455
        %v457 = vsel %vm378, %v372, 0.0
        %458 = vadd.xlane.f32.xlu0 %v457
        %v459 = vpop.xlane.xlu0 %458
        %v460 = vsel %vm378, %v373, 0.0
        %461 = vadd.xlane.f32.xlu0 %v460
        %v462 = vpop.xlane.xlu0 %461
        %v463 = vsel %vm378, %v374, 0.0
        %464 = vadd.xlane.f32.xlu0 %v463
        %v465 = vpop.xlane.xlu0 %464
        %v466 = vsel %vm378, %v375, 0.0
        %467 = vadd.xlane.f32.xlu0 %v466
        %v468 = vpop.xlane.xlu0 %467
        %v469 = vsel %vm378, %v376, 0.0
        %470 = vadd.xlane.f32.xlu0 %v469
        %v471 = vpop.xlane.xlu0 %470
        %v472 = vsel %vm378, %v377, 0.0
        %473 = vadd.xlane.f32.xlu0 %v472
        %v474 = vpop.xlane.xlu0 %473
        %v475 = vld [vmem:[%s3] sm:$0xff]
        %v476 = vld [vmem:[%s3 + $0x8] sm:$0xff]
        %v477 = vld [vmem:[%s3 + $0x10] sm:$0xff]
        %v478 = vld [vmem:[%s3 + $0x18] sm:$0xff]
        %v479 = vld [vmem:[%s3 + $0x20] sm:$0xff]
        %v480 = vld [vmem:[%s3 + $0x28] sm:$0xff]
        %v481 = vld [vmem:[%s3 + $0x30] sm:$0xff]
        %v482 = vld [vmem:[%s3 + $0x38] sm:$0xff]
        %v483 = vld [vmem:[%s3 + $0x40] sm:$0xff]
        %v484 = vld [vmem:[%s3 + $0x48] sm:$0xff]
        %v485 = vld [vmem:[%s3 + $0x50] sm:$0xff]
        %v486 = vld [vmem:[%s3 + $0x58] sm:$0xff]
        %v487 = vld [vmem:[%s3 + $0x60] sm:$0xff]
        %v488 = vld [vmem:[%s3 + $0x68] sm:$0xff]
        %v489 = vld [vmem:[%s3 + $0x70] sm:$0xff]
        %v490 = vld [vmem:[%s3 + $0x78] sm:$0xff]
        %491 = vmatprep.subr.mxu0 0.0
        %492 = vmatpush1.msra.mxu0 %v475
        %493 = vmatprep.subr.mxu0 0.0
        %494 = vmatpush1.msra.mxu0 %v476
        %495 = vmatprep.subr.mxu0 0.0
        %496 = vmatpush1.msra.mxu0 %v477
        %497 = vmatprep.subr.mxu0 0.0
        %498 = vmatpush1.msra.mxu0 %v478
        %499 = vmatprep.subr.mxu0 0.0
        %500 = vmatpush1.msra.mxu0 %v479
        %501 = vmatprep.subr.mxu0 0.0
        %502 = vmatpush1.msra.mxu0 %v480
        %503 = vmatprep.subr.mxu0 0.0
        %504 = vmatpush1.msra.mxu0 %v481
        %505 = vmatprep.subr.mxu0 0.0
        %506 = vmatpush1.msra.mxu0 %v482
        %507 = vmatprep.subr.mxu0 0.0
        %508 = vmatpush1.msra.mxu0 %v483
        %509 = vmatprep.subr.mxu0 0.0
        %510 = vmatpush1.msra.mxu0 %v484
        %511 = vmatprep.subr.mxu0 0.0
        %512 = vmatpush1.msra.mxu0 %v485
        %513 = vmatprep.subr.mxu0 0.0
        %514 = vmatpush1.msra.mxu0 %v486
        %515 = vmatprep.subr.mxu0 0.0
        %516 = vmatpush1.msra.mxu0 %v487
        %517 = vmatprep.subr.mxu0 0.0
        %518 = vmatpush1.msra.mxu0 %v488
        %519 = vmatprep.subr.mxu0 0.0
        %520 = vmatpush1.msra.mxu0 %v489
        %521 = vmatprep.subr.mxu0 0.0
        %522 = vmatpush1.msra.mxu0 %v490
        %523 = vmatprep.subr.mxu0 0.0
        %524 = vmatpush1.msra.mxu0 0.0
        %525 = vmatprep.subr.mxu0 0.0
        %526 = vmatpush1.msra.mxu0 0.0
        %527 = vmatprep.subr.mxu0 0.0
        %528 = vmatpush1.msra.mxu0 0.0
        %529 = vmatprep.subr.mxu0 0.0
        %530 = vmatpush1.msra.mxu0 0.0
        %531 = vmatprep.subr.mxu0 0.0
        %532 = vmatpush1.msra.mxu0 0.0
        %533 = vmatprep.subr.mxu0 0.0
        %534 = vmatpush1.msra.mxu0 0.0
        %535 = vmatprep.subr.mxu0 0.0
        %536 = vmatpush1.msra.mxu0 0.0
        %537 = vmatprep.subr.mxu0 0.0
        %538 = vmatpush1.msra.mxu0 0.0
        %539 = vmatprep.subr.mxu0 0.0
        %540 = vmatpush1.msra.mxu0 0.0
        %541 = vmatprep.subr.mxu0 0.0
        %542 = vmatpush1.msra.mxu0 0.0
        %543 = vmatprep.subr.mxu0 0.0
        %544 = vmatpush1.msra.mxu0 0.0
        %545 = vmatprep.subr.mxu0 0.0
        %546 = vmatpush1.msra.mxu0 0.0
        %547 = vmatprep.subr.mxu0 0.0
        %548 = vmatpush1.msra.mxu0 0.0
        %549 = vmatprep.subr.mxu0 0.0
        %550 = vmatpush1.msra.mxu0 0.0
        %551 = vmatprep.subr.mxu0 0.0
        %552 = vmatpush1.msra.mxu0 0.0
        %553 = vmatprep.subr.mxu0 0.0
        %554 = vmatpush1.msra.mxu0 0.0
        %555 = vmatprep.mubr.f32.mxu0 0.0
        %556 = vmatmul.mubr.f32.gmra.mrb[0].mxu0 %v307
        %v557 = vpop.f32.mrb[0].mxu0
        %v558 = vadd.f32 0.0, %v557
        %v559 = vpop.f32.mrb[0].mxu0
        %560 = vmatprep.mubr.f32.mxu0 0.0
        %561 = vmatmul.mubr.f32.gmra.mrb[0].mxu0 %v308
        %v562 = vpop.f32.mrb[0].mxu0
        %v563 = vadd.f32 0.0, %v562
        %v564 = vpop.f32.mrb[0].mxu0
        %565 = vmatprep.mubr.f32.mxu0 0.0
        %566 = vmatmul.mubr.f32.gmra.mrb[0].mxu0 %v309
        %v567 = vpop.f32.mrb[0].mxu0
        %v568 = vadd.f32 0.0, %v567
        %v569 = vpop.f32.mrb[0].mxu0
        %570 = vmatprep.mubr.f32.mxu0 0.0
        %571 = vmatmul.mubr.f32.gmra.mrb[0].mxu0 %v310
        %v572 = vpop.f32.mrb[0].mxu0
        %v573 = vadd.f32 0.0, %v572
        %v574 = vpop.f32.mrb[0].mxu0
        %575 = vmatprep.mubr.f32.mxu0 0.0
        %576 = vmatmul.mubr.f32.gmra.mrb[0].mxu0 %v311
        %v577 = vpop.f32.mrb[0].mxu0
        %v578 = vadd.f32 0.0, %v577
        %v579 = vpop.f32.mrb[0].mxu0
        %580 = vmatprep.mubr.f32.mxu0 0.0
        %581 = vmatmul.mubr.f32.gmra.mrb[0].mxu0 %v312
        %v582 = vpop.f32.mrb[0].mxu0
        %v583 = vadd.f32 0.0, %v582
        %v584 = vpop.f32.mrb[0].mxu0
        %585 = vmatprep.mubr.f32.mxu0 0.0
        %586 = vmatmul.mubr.f32.gmra.mrb[0].mxu0 %v313
        %v587 = vpop.f32.mrb[0].mxu0
        %v588 = vadd.f32 0.0, %v587
        %v589 = vpop.f32.mrb[0].mxu0
        %590 = vmatprep.mubr.f32.mxu0 0.0
        %591 = vmatmul.mubr.f32.gmra.mrb[0].mxu0 %v314
        %v592 = vpop.f32.mrb[0].mxu0
        %v593 = vadd.f32 0.0, %v592
        %v594 = vpop.f32.mrb[0].mxu0
        %595 = vmatprep.mubr.f32.mxu0 0.0
        %596 = vmatmul.mubr.f32.gmra.mrb[0].mxu0 %v315
        %v597 = vpop.f32.mrb[0].mxu0
        %v598 = vadd.f32 0.0, %v597
        %v599 = vpop.f32.mrb[0].mxu0
        %600 = vmatprep.mubr.f32.mxu0 0.0
        %601 = vmatmul.mubr.f32.gmra.mrb[0].mxu0 %v316
        %v602 = vpop.f32.mrb[0].mxu0
        %v603 = vadd.f32 0.0, %v602
        %v604 = vpop.f32.mrb[0].mxu0
        %605 = vmatprep.mubr.f32.mxu0 0.0
        %606 = vmatmul.mubr.f32.gmra.mrb[0].mxu0 %v317
        %v607 = vpop.f32.mrb[0].mxu0
        %v608 = vadd.f32 0.0, %v607
        %v609 = vpop.f32.mrb[0].mxu0
        %610 = vmatprep.mubr.f32.mxu0 0.0
        %611 = vmatmul.mubr.f32.gmra.mrb[0].mxu0 %v318
        %v612 = vpop.f32.mrb[0].mxu0
        %v613 = vadd.f32 0.0, %v612
        %v614 = vpop.f32.mrb[0].mxu0
        %615 = vmatprep.mubr.f32.mxu0 0.0
        %616 = vmatmul.mubr.f32.gmra.mrb[0].mxu0 %v319
        %v617 = vpop.f32.mrb[0].mxu0
        %v618 = vadd.f32 0.0, %v617
        %v619 = vpop.f32.mrb[0].mxu0
        %620 = vmatprep.mubr.f32.mxu0 0.0
        %621 = vmatmul.mubr.f32.gmra.mrb[0].mxu0 %v320
        %v622 = vpop.f32.mrb[0].mxu0
        %v623 = vadd.f32 0.0, %v622
        %v624 = vpop.f32.mrb[0].mxu0
        %625 = vmatprep.mubr.f32.mxu0 0.0
        %626 = vmatmul.mubr.f32.gmra.mrb[0].mxu0 %v321
        %v627 = vpop.f32.mrb[0].mxu0
        %v628 = vadd.f32 0.0, %v627
        %v629 = vpop.f32.mrb[0].mxu0
        %630 = vmatprep.mubr.f32.mxu0 0.0
        %631 = vmatmul.mubr.f32.gmra.mrb[0].mxu0 %v322
        %v632 = vpop.f32.mrb[0].mxu0
        %v633 = vadd.f32 0.0, %v632
        %v634 = vpop.f32.mrb[0].mxu0
        %635 = vmatprep.mubr.f32.mxu0 0.0
        %636 = vmatmul.mubr.f32.gmra.mrb[0].mxu0 %v323
        %v637 = vpop.f32.mrb[0].mxu0
        %v638 = vadd.f32 0.0, %v637
        %v639 = vpop.f32.mrb[0].mxu0
        %640 = vmatprep.mubr.f32.mxu0 0.0
        %641 = vmatmul.mubr.f32.gmra.mrb[0].mxu0 %v324
        %v642 = vpop.f32.mrb[0].mxu0
        %v643 = vadd.f32 0.0, %v642
        %v644 = vpop.f32.mrb[0].mxu0
        %645 = vmatprep.mubr.f32.mxu0 0.0
        %646 = vmatmul.mubr.f32.gmra.mrb[0].mxu0 %v325
        %v647 = vpop.f32.mrb[0].mxu0
        %v648 = vadd.f32 0.0, %v647
        %v649 = vpop.f32.mrb[0].mxu0
        %650 = vmatprep.mubr.f32.mxu0 0.0
        %651 = vmatmul.mubr.f32.gmra.mrb[0].mxu0 %v326
        %v652 = vpop.f32.mrb[0].mxu0
        %v653 = vadd.f32 0.0, %v652
        %v654 = vpop.f32.mrb[0].mxu0
        %655 = vmatprep.mubr.f32.mxu0 0.0
        %656 = vmatmul.mubr.f32.gmra.mrb[0].mxu0 %v327
        %v657 = vpop.f32.mrb[0].mxu0
        %v658 = vadd.f32 0.0, %v657
        %v659 = vpop.f32.mrb[0].mxu0
        %660 = vmatprep.mubr.f32.mxu0 0.0
        %661 = vmatmul.mubr.f32.gmra.mrb[0].mxu0 %v328
        %v662 = vpop.f32.mrb[0].mxu0
        %v663 = vadd.f32 0.0, %v662
        %v664 = vpop.f32.mrb[0].mxu0
        %665 = vmatprep.mubr.f32.mxu0 0.0
        %666 = vmatmul.mubr.f32.gmra.mrb[0].mxu0 %v329
        %v667 = vpop.f32.mrb[0].mxu0
        %v668 = vadd.f32 0.0, %v667
        %v669 = vpop.f32.mrb[0].mxu0
        %670 = vmatprep.mubr.f32.mxu0 0.0
        %671 = vmatmul.mubr.f32.gmra.mrb[0].mxu0 %v330
        %v672 = vpop.f32.mrb[0].mxu0
        %v673 = vadd.f32 0.0, %v672
        %v674 = vpop.f32.mrb[0].mxu0
        %675 = vmatprep.mubr.f32.mxu0 0.0
        %676 = vmatmul.mubr.f32.gmra.mrb[0].mxu0 %v331
        %v677 = vpop.f32.mrb[0].mxu0
        %v678 = vadd.f32 0.0, %v677
        %v679 = vpop.f32.mrb[0].mxu0
        %680 = vmatprep.mubr.f32.mxu0 0.0
        %681 = vmatmul.mubr.f32.gmra.mrb[0].mxu0 %v332
        %v682 = vpop.f32.mrb[0].mxu0
        %v683 = vadd.f32 0.0, %v682
        %v684 = vpop.f32.mrb[0].mxu0
        %685 = vmatprep.mubr.f32.mxu0 0.0
        %686 = vmatmul.mubr.f32.gmra.mrb[0].mxu0 %v333
        %v687 = vpop.f32.mrb[0].mxu0
        %v688 = vadd.f32 0.0, %v687
        %v689 = vpop.f32.mrb[0].mxu0
        %690 = vmatprep.mubr.f32.mxu0 0.0
        %691 = vmatmul.mubr.f32.gmra.mrb[0].mxu0 %v334
        %v692 = vpop.f32.mrb[0].mxu0
        %v693 = vadd.f32 0.0, %v692
        %v694 = vpop.f32.mrb[0].mxu0
        %695 = vmatprep.mubr.f32.mxu0 0.0
        %696 = vmatmul.mubr.f32.gmra.mrb[0].mxu0 %v335
        %v697 = vpop.f32.mrb[0].mxu0
        %v698 = vadd.f32 0.0, %v697
        %v699 = vpop.f32.mrb[0].mxu0
        %700 = vmatprep.mubr.f32.mxu0 0.0
        %701 = vmatmul.mubr.f32.gmra.mrb[0].mxu0 %v336
        %v702 = vpop.f32.mrb[0].mxu0
        %v703 = vadd.f32 0.0, %v702
        %v704 = vpop.f32.mrb[0].mxu0
        %705 = vmatprep.mubr.f32.mxu0 0.0
        %706 = vmatmul.mubr.f32.gmra.mrb[0].mxu0 %v337
        %v707 = vpop.f32.mrb[0].mxu0
        %v708 = vadd.f32 0.0, %v707
        %v709 = vpop.f32.mrb[0].mxu0
        %710 = vmatprep.mubr.f32.mxu0 0.0
        %711 = vmatmul.mubr.f32.gmra.mrb[0].mxu0 %v338
        %v712 = vpop.f32.mrb[0].mxu0
        %v713 = vadd.f32 0.0, %v712
        %v714 = vpop.f32.mrb[0].mxu0
        %715 = vdwg.mxu0
        %v716 = vadd.f32 %v381, %v558
        %v717 = vadd.f32 %v384, %v563
        %v718 = vadd.f32 %v387, %v568
        %v719 = vadd.f32 %v390, %v573
        %v720 = vadd.f32 %v393, %v578
        %v721 = vadd.f32 %v396, %v583
        %v722 = vadd.f32 %v399, %v588
        %v723 = vadd.f32 %v402, %v593
        %v724 = vadd.f32 %v405, %v598
        %v725 = vadd.f32 %v408, %v603
        %v726 = vadd.f32 %v411, %v608
        %v727 = vadd.f32 %v414, %v613
        %v728 = vadd.f32 %v417, %v618
        %v729 = vadd.f32 %v420, %v623
        %v730 = vadd.f32 %v423, %v628
        %v731 = vadd.f32 %v426, %v633
        %v732 = vadd.f32 %v429, %v638
        %v733 = vadd.f32 %v432, %v643
        %v734 = vadd.f32 %v435, %v648
        %v735 = vadd.f32 %v438, %v653
        %v736 = vadd.f32 %v441, %v658
        %v737 = vadd.f32 %v444, %v663
        %v738 = vadd.f32 %v447, %v668
        %v739 = vadd.f32 %v450, %v673
        %v740 = vadd.f32 %v453, %v678
        %v741 = vadd.f32 %v456, %v683
        %v742 = vadd.f32 %v459, %v688
        %v743 = vadd.f32 %v462, %v693
        %v744 = vadd.f32 %v465, %v698
        %v745 = vadd.f32 %v468, %v703
        %v746 = vadd.f32 %v471, %v708
        %v747 = vadd.f32 %v474, %v713
        %vm748 = vcmask 64512
        %v749 = vsel %vm748, %v716, -inf
        %750 = vmax.xlane.f32.xlu0 %v749
        %v751 = vpop.xlane.xlu0 %750
        %v752 = vsel %vm748, %v717, -inf
        %753 = vmax.xlane.f32.xlu0 %v752
        %v754 = vpop.xlane.xlu0 %753
        %v755 = vsel %vm748, %v718, -inf
        %756 = vmax.xlane.f32.xlu0 %v755
        %v757 = vpop.xlane.xlu0 %756
        %v758 = vsel %vm748, %v719, -inf
        %759 = vmax.xlane.f32.xlu0 %v758
        %v760 = vpop.xlane.xlu0 %759
        %v761 = vsel %vm748, %v720, -inf
        %762 = vmax.xlane.f32.xlu0 %v761
        %v763 = vpop.xlane.xlu0 %762
        %v764 = vsel %vm748, %v721, -inf
        %765 = vmax.xlane.f32.xlu0 %v764
        %v766 = vpop.xlane.xlu0 %765
        %v767 = vsel %vm748, %v722, -inf
        %768 = vmax.xlane.f32.xlu0 %v767
        %v769 = vpop.xlane.xlu0 %768
        %v770 = vsel %vm748, %v723, -inf
        %771 = vmax.xlane.f32.xlu0 %v770
        %v772 = vpop.xlane.xlu0 %771
        %v773 = vsel %vm748, %v724, -inf
        %774 = vmax.xlane.f32.xlu0 %v773
        %v775 = vpop.xlane.xlu0 %774
        %v776 = vsel %vm748, %v725, -inf
        %777 = vmax.xlane.f32.xlu0 %v776
        %v778 = vpop.xlane.xlu0 %777
        %v779 = vsel %vm748, %v726, -inf
        %780 = vmax.xlane.f32.xlu0 %v779
        %v781 = vpop.xlane.xlu0 %780
        %v782 = vsel %vm748, %v727, -inf
        %783 = vmax.xlane.f32.xlu0 %v782
        %v784 = vpop.xlane.xlu0 %783
        %v785 = vsel %vm748, %v728, -inf
        %786 = vmax.xlane.f32.xlu0 %v785
        %v787 = vpop.xlane.xlu0 %786
        %v788 = vsel %vm748, %v729, -inf
        %789 = vmax.xlane.f32.xlu0 %v788
        %v790 = vpop.xlane.xlu0 %789
        %v791 = vsel %vm748, %v730, -inf
        %792 = vmax.xlane.f32.xlu0 %v791
        %v793 = vpop.xlane.xlu0 %792
        %v794 = vsel %vm748, %v731, -inf
        %795 = vmax.xlane.f32.xlu0 %v794
        %v796 = vpop.xlane.xlu0 %795
        %v797 = vsel %vm748, %v732, -inf
        %798 = vmax.xlane.f32.xlu0 %v797
        %v799 = vpop.xlane.xlu0 %798
        %v800 = vsel %vm748, %v733, -inf
        %801 = vmax.xlane.f32.xlu0 %v800
        %v802 = vpop.xlane.xlu0 %801
        %v803 = vsel %vm748, %v734, -inf
        %804 = vmax.xlane.f32.xlu0 %v803
        %v805 = vpop.xlane.xlu0 %804
        %v806 = vsel %vm748, %v735, -inf
        %807 = vmax.xlane.f32.xlu0 %v806
        %v808 = vpop.xlane.xlu0 %807
        %v809 = vsel %vm748, %v736, -inf
        %810 = vmax.xlane.f32.xlu0 %v809
        %v811 = vpop.xlane.xlu0 %810
        %v812 = vsel %vm748, %v737, -inf
        %813 = vmax.xlane.f32.xlu0 %v812
        %v814 = vpop.xlane.xlu0 %813
        %v815 = vsel %vm748, %v738, -inf
        %816 = vmax.xlane.f32.xlu0 %v815
        %v817 = vpop.xlane.xlu0 %816
        %v818 = vsel %vm748, %v739, -inf
        %819 = vmax.xlane.f32.xlu0 %v818
        %v820 = vpop.xlane.xlu0 %819
        %v821 = vsel %vm748, %v740, -inf
        %822 = vmax.xlane.f32.xlu0 %v821
        %v823 = vpop.xlane.xlu0 %822
        %v824 = vsel %vm748, %v741, -inf
        %825 = vmax.xlane.f32.xlu0 %v824
        %v826 = vpop.xlane.xlu0 %825
        %v827 = vsel %vm748, %v742, -inf
        %828 = vmax.xlane.f32.xlu0 %v827
        %v829 = vpop.xlane.xlu0 %828
        %v830 = vsel %vm748, %v743, -inf
        %831 = vmax.xlane.f32.xlu0 %v830
        %v832 = vpop.xlane.xlu0 %831
        %v833 = vsel %vm748, %v744, -inf
        %834 = vmax.xlane.f32.xlu0 %v833
        %v835 = vpop.xlane.xlu0 %834
        %v836 = vsel %vm748, %v745, -inf
        %837 = vmax.xlane.f32.xlu0 %v836
        %v838 = vpop.xlane.xlu0 %837
        %v839 = vsel %vm748, %v746, -inf
        %840 = vmax.xlane.f32.xlu0 %v839
        %v841 = vpop.xlane.xlu0 %840
        %v842 = vsel %vm748, %v747, -inf
        %843 = vmax.xlane.f32.xlu0 %v842
        %v844 = vpop.xlane.xlu0 %843
        %v845 = vsub.f32 %v716, %v751
        %v846 = vsub.f32 %v717, %v754
        %v847 = vsub.f32 %v718, %v757
        %v848 = vsub.f32 %v719, %v760
        %v849 = vsub.f32 %v720, %v763
        %v850 = vsub.f32 %v721, %v766
        %v851 = vsub.f32 %v722, %v769
        %v852 = vsub.f32 %v723, %v772
        %v853 = vsub.f32 %v724, %v775
        %v854 = vsub.f32 %v725, %v778
        %v855 = vsub.f32 %v726, %v781
        %v856 = vsub.f32 %v727, %v784
        %v857 = vsub.f32 %v728, %v787
        %v858 = vsub.f32 %v729, %v790
        %v859 = vsub.f32 %v730, %v793
        %v860 = vsub.f32 %v731, %v796
        %v861 = vsub.f32 %v732, %v799
        %v862 = vsub.f32 %v733, %v802
        %v863 = vsub.f32 %v734, %v805
        %v864 = vsub.f32 %v735, %v808
        %v865 = vsub.f32 %v736, %v811
        %v866 = vsub.f32 %v737, %v814
        %v867 = vsub.f32 %v738, %v817
        %v868 = vsub.f32 %v739, %v820
        %v869 = vsub.f32 %v740, %v823
        %v870 = vsub.f32 %v741, %v826
        %v871 = vsub.f32 %v742, %v829
        %v872 = vsub.f32 %v743, %v832
        %v873 = vsub.f32 %v744, %v835
        %v874 = vsub.f32 %v745, %v838
        %v875 = vsub.f32 %v746, %v841
        %v876 = vsub.f32 %v747, %v844
        %v877 = vmul.f32 %v845, 1.442695
        %v878 = vpow.pop %v877
        %v879 = vmul.f32 %v846, 1.442695
        %v880 = vpow.pop %v879
        %v881 = vmul.f32 %v847, 1.442695
        %v882 = vpow.pop %v881
        %v883 = vmul.f32 %v848, 1.442695
        %v884 = vpow.pop %v883
        %v885 = vmul.f32 %v849, 1.442695
        %v886 = vpow.pop %v885
        %v887 = vmul.f32 %v850, 1.442695
        %v888 = vpow.pop %v887
        %v889 = vmul.f32 %v851, 1.442695
        %v890 = vpow.pop %v889
        %v891 = vmul.f32 %v852, 1.442695
        %v892 = vpow.pop %v891
        %v893 = vmul.f32 %v853, 1.442695
        %v894 = vpow.pop %v893
        %v895 = vmul.f32 %v854, 1.442695
        %v896 = vpow.pop %v895
        %v897 = vmul.f32 %v855, 1.442695
        %v898 = vpow.pop %v897
        %v899 = vmul.f32 %v856, 1.442695
        %v900 = vpow.pop %v899
        %v901 = vmul.f32 %v857, 1.442695
        %v902 = vpow.pop %v901
        %v903 = vmul.f32 %v858, 1.442695
        %v904 = vpow.pop %v903
        %v905 = vmul.f32 %v859, 1.442695
        %v906 = vpow.pop %v905
        %v907 = vmul.f32 %v860, 1.442695
        %v908 = vpow.pop %v907
        %v909 = vmul.f32 %v861, 1.442695
        %v910 = vpow.pop %v909
        %v911 = vmul.f32 %v862, 1.442695
        %v912 = vpow.pop %v911
        %v913 = vmul.f32 %v863, 1.442695
        %v914 = vpow.pop %v913
        %v915 = vmul.f32 %v864, 1.442695
        %v916 = vpow.pop %v915
        %v917 = vmul.f32 %v865, 1.442695
        %v918 = vpow.pop %v917
        %v919 = vmul.f32 %v866, 1.442695
        %v920 = vpow.pop %v919
        %v921 = vmul.f32 %v867, 1.442695
        %v922 = vpow.pop %v921
        %v923 = vmul.f32 %v868, 1.442695
        %v924 = vpow.pop %v923
        %v925 = vmul.f32 %v869, 1.442695
        %v926 = vpow.pop %v925
        %v927 = vmul.f32 %v870, 1.442695
        %v928 = vpow.pop %v927
        %v929 = vmul.f32 %v871, 1.442695
        %v930 = vpow.pop %v929
        %v931 = vmul.f32 %v872, 1.442695
        %v932 = vpow.pop %v931
        %v933 = vmul.f32 %v873, 1.442695
        %v934 = vpow.pop %v933
        %v935 = vmul.f32 %v874, 1.442695
        %v936 = vpow.pop %v935
        %v937 = vmul.f32 %v875, 1.442695
        %v938 = vpow.pop %v937
        %v939 = vmul.f32 %v876, 1.442695
        %v940 = vpow.pop %v939
        %v941 = vsel %vm748, %v878, 0.0
        %942 = vadd.xlane.f32.xlu0 %v941
        %v943 = vpop.xlane.xlu0 %942
        %v944 = vsel %vm748, %v880, 0.0
        %945 = vadd.xlane.f32.xlu0 %v944
        %v946 = vpop.xlane.xlu0 %945
        %v947 = vsel %vm748, %v882, 0.0
        %948 = vadd.xlane.f32.xlu0 %v947
        %v949 = vpop.xlane.xlu0 %948
        %v950 = vsel %vm748, %v884, 0.0
        %951 = vadd.xlane.f32.xlu0 %v950
        %v952 = vpop.xlane.xlu0 %951
        %v953 = vsel %vm748, %v886, 0.0
        %954 = vadd.xlane.f32.xlu0 %v953
        %v955 = vpop.xlane.xlu0 %954
        %v956 = vsel %vm748, %v888, 0.0
        %957 = vadd.xlane.f32.xlu0 %v956
        %v958 = vpop.xlane.xlu0 %957
        %v959 = vsel %vm748, %v890, 0.0
        %960 = vadd.xlane.f32.xlu0 %v959
        %v961 = vpop.xlane.xlu0 %960
        %v962 = vsel %vm748, %v892, 0.0
        %963 = vadd.xlane.f32.xlu0 %v962
        %v964 = vpop.xlane.xlu0 %963
        %v965 = vsel %vm748, %v894, 0.0
        %966 = vadd.xlane.f32.xlu0 %v965
        %v967 = vpop.xlane.xlu0 %966
        %v968 = vsel %vm748, %v896, 0.0
        %969 = vadd.xlane.f32.xlu0 %v968
        %v970 = vpop.xlane.xlu0 %969
        %v971 = vsel %vm748, %v898, 0.0
        %972 = vadd.xlane.f32.xlu0 %v971
        %v973 = vpop.xlane.xlu0 %972
        %v974 = vsel %vm748, %v900, 0.0
        %975 = vadd.xlane.f32.xlu0 %v974
        %v976 = vpop.xlane.xlu0 %975
        %v977 = vsel %vm748, %v902, 0.0
        %978 = vadd.xlane.f32.xlu0 %v977
        %v979 = vpop.xlane.xlu0 %978
        %v980 = vsel %vm748, %v904, 0.0
        %981 = vadd.xlane.f32.xlu0 %v980
        %v982 = vpop.xlane.xlu0 %981
        %v983 = vsel %vm748, %v906, 0.0
        %984 = vadd.xlane.f32.xlu0 %v983
        %v985 = vpop.xlane.xlu0 %984
        %v986 = vsel %vm748, %v908, 0.0
        %987 = vadd.xlane.f32.xlu0 %v986
        %v988 = vpop.xlane.xlu0 %987
        %v989 = vsel %vm748, %v910, 0.0
        %990 = vadd.xlane.f32.xlu0 %v989
        %v991 = vpop.xlane.xlu0 %990
        %v992 = vsel %vm748, %v912, 0.0
        %993 = vadd.xlane.f32.xlu0 %v992
        %v994 = vpop.xlane.xlu0 %993
        %v995 = vsel %vm748, %v914, 0.0
        %996 = vadd.xlane.f32.xlu0 %v995
        %v997 = vpop.xlane.xlu0 %996
        %v998 = vsel %vm748, %v916, 0.0
        %999 = vadd.xlane.f32.xlu0 %v998
        %v1000 = vpop.xlane.xlu0 %999
        %v1001 = vsel %vm748, %v918, 0.0
        %1002 = vadd.xlane.f32.xlu0 %v1001
        %v1003 = vpop.xlane.xlu0 %1002
        %v1004 = vsel %vm748, %v920, 0.0
        %1005 = vadd.xlane.f32.xlu0 %v1004
        %v1006 = vpop.xlane.xlu0 %1005
        %v1007 = vsel %vm748, %v922, 0.0
        %1008 = vadd.xlane.f32.xlu0 %v1007
        %v1009 = vpop.xlane.xlu0 %1008
        %v1010 = vsel %vm748, %v924, 0.0
        %1011 = vadd.xlane.f32.xlu0 %v1010
        %v1012 = vpop.xlane.xlu0 %1011
        %v1013 = vsel %vm748, %v926, 0.0
        %1014 = vadd.xlane.f32.xlu0 %v1013
        %v1015 = vpop.xlane.xlu0 %1014
        %v1016 = vsel %vm748, %v928, 0.0
        %1017 = vadd.xlane.f32.xlu0 %v1016
        %v1018 = vpop.xlane.xlu0 %1017
        %v1019 = vsel %vm748, %v930, 0.0
        %1020 = vadd.xlane.f32.xlu0 %v1019
        %v1021 = vpop.xlane.xlu0 %1020
        %v1022 = vsel %vm748, %v932, 0.0
        %1023 = vadd.xlane.f32.xlu0 %v1022
        %v1024 = vpop.xlane.xlu0 %1023
        %v1025 = vsel %vm748, %v934, 0.0
        %1026 = vadd.xlane.f32.xlu0 %v1025
        %v1027 = vpop.xlane.xlu0 %1026
        %v1028 = vsel %vm748, %v936, 0.0
        %1029 = vadd.xlane.f32.xlu0 %v1028
        %v1030 = vpop.xlane.xlu0 %1029
        %v1031 = vsel %vm748, %v938, 0.0
        %1032 = vadd.xlane.f32.xlu0 %v1031
        %v1033 = vpop.xlane.xlu0 %1032
        %v1034 = vsel %vm748, %v940, 0.0
        %1035 = vadd.xlane.f32.xlu0 %v1034
        %v1036 = vpop.xlane.xlu0 %1035
        %v1037 = vrcp.pop %v943
        %v1038 = vmul.f32 %v878, %v1037
        %v1039 = vrcp.pop %v946
        %v1040 = vmul.f32 %v880, %v1039
        %v1041 = vrcp.pop %v949
        %v1042 = vmul.f32 %v882, %v1041
        %v1043 = vrcp.pop %v952
        %v1044 = vmul.f32 %v884, %v1043
        %v1045 = vrcp.pop %v955
        %v1046 = vmul.f32 %v886, %v1045
        %v1047 = vrcp.pop %v958
        %v1048 = vmul.f32 %v888, %v1047
        %v1049 = vrcp.pop %v961
        %v1050 = vmul.f32 %v890, %v1049
        %v1051 = vrcp.pop %v964
        %v1052 = vmul.f32 %v892, %v1051
        %v1053 = vrcp.pop %v967
        %v1054 = vmul.f32 %v894, %v1053
        %v1055 = vrcp.pop %v970
        %v1056 = vmul.f32 %v896, %v1055
        %v1057 = vrcp.pop %v973
        %v1058 = vmul.f32 %v898, %v1057
        %v1059 = vrcp.pop %v976
        %v1060 = vmul.f32 %v900, %v1059
        %v1061 = vrcp.pop %v979
        %v1062 = vmul.f32 %v902, %v1061
        %v1063 = vrcp.pop %v982
        %v1064 = vmul.f32 %v904, %v1063
        %v1065 = vrcp.pop %v985
        %v1066 = vmul.f32 %v906, %v1065
        %v1067 = vrcp.pop %v988
        %v1068 = vmul.f32 %v908, %v1067
        %v1069 = vrcp.pop %v991
        %v1070 = vmul.f32 %v910, %v1069
        %v1071 = vrcp.pop %v994
        %v1072 = vmul.f32 %v912, %v1071
        %v1073 = vrcp.pop %v997
        %v1074 = vmul.f32 %v914, %v1073
        %v1075 = vrcp.pop %v1000
        %v1076 = vmul.f32 %v916, %v1075
        %v1077 = vrcp.pop %v1003
        %v1078 = vmul.f32 %v918, %v1077
        %v1079 = vrcp.pop %v1006
        %v1080 = vmul.f32 %v920, %v1079
        %v1081 = vrcp.pop %v1009
        %v1082 = vmul.f32 %v922, %v1081
        %v1083 = vrcp.pop %v1012
        %v1084 = vmul.f32 %v924, %v1083
        %v1085 = vrcp.pop %v1015
        %v1086 = vmul.f32 %v926, %v1085
        %v1087 = vrcp.pop %v1018
        %v1088 = vmul.f32 %v928, %v1087
        %v1089 = vrcp.pop %v1021
        %v1090 = vmul.f32 %v930, %v1089
        %v1091 = vrcp.pop %v1024
        %v1092 = vmul.f32 %v932, %v1091
        %v1093 = vrcp.pop %v1027
        %v1094 = vmul.f32 %v934, %v1093
        %v1095 = vrcp.pop %v1030
        %v1096 = vmul.f32 %v936, %v1095
        %v1097 = vrcp.pop %v1033
        %v1098 = vmul.f32 %v938, %v1097
        %v1099 = vrcp.pop %v1036
        %v1100 = vmul.f32 %v940, %v1099
        %v1101 = vld [vmem:[%s4] sm:$0xff]
        %v1103 = vsel %vm748, %v1038, 0
        %v1106 = vsel %vm748, %v1040, 0
        %v1109 = vsel %vm748, %v1042, 0
        %v1112 = vsel %vm748, %v1044, 0
        %v1115 = vsel %vm748, %v1046, 0
        %v1118 = vsel %vm748, %v1048, 0
        %v1121 = vsel %vm748, %v1050, 0
        %v1124 = vsel %vm748, %v1052, 0
        %v1127 = vsel %vm748, %v1054, 0
        %v1130 = vsel %vm748, %v1056, 0
        %v1133 = vsel %vm748, %v1058, 0
        %v1136 = vsel %vm748, %v1060, 0
        %v1139 = vsel %vm748, %v1062, 0
        %v1142 = vsel %vm748, %v1064, 0
        %v1145 = vsel %vm748, %v1066, 0
        %v1148 = vsel %vm748, %v1068, 0
        %v1151 = vsel %vm748, %v1070, 0
        %v1154 = vsel %vm748, %v1072, 0
        %v1157 = vsel %vm748, %v1074, 0
        %v1160 = vsel %vm748, %v1076, 0
        %v1163 = vsel %vm748, %v1078, 0
        %v1166 = vsel %vm748, %v1080, 0
        %v1169 = vsel %vm748, %v1082, 0
        %v1172 = vsel %vm748, %v1084, 0
        %v1175 = vsel %vm748, %v1086, 0
        %v1178 = vsel %vm748, %v1088, 0
        %v1181 = vsel %vm748, %v1090, 0
        %v1184 = vsel %vm748, %v1092, 0
        %v1187 = vsel %vm748, %v1094, 0
        %v1190 = vsel %vm748, %v1096, 0
        %v1193 = vsel %vm748, %v1098, 0
        %v1196 = vsel %vm748, %v1100, 0
        %1198 = vmatprep.subr.mxu0 0.0
        %1199 = vmatpush1.msra.mxu0 %v1101
        %1200 = vmatprep.subr.mxu0 0.0
        %1201 = vmatpush1.msra.mxu0 0.0
        %1202 = vmatprep.subr.mxu0 0.0
        %1203 = vmatpush1.msra.mxu0 0.0
        %1204 = vmatprep.subr.mxu0 0.0
        %1205 = vmatpush1.msra.mxu0 0.0
        %1206 = vmatprep.subr.mxu0 0.0
        %1207 = vmatpush1.msra.mxu0 0.0
        %1208 = vmatprep.subr.mxu0 0.0
        %1209 = vmatpush1.msra.mxu0 0.0
        %1210 = vmatprep.subr.mxu0 0.0
        %1211 = vmatpush1.msra.mxu0 0.0
        %1212 = vmatprep.subr.mxu0 0.0
        %1213 = vmatpush1.msra.mxu0 0.0
        %1214 = vmatprep.subr.mxu0 0.0
        %1215 = vmatpush1.msra.mxu0 0.0
        %1216 = vmatprep.subr.mxu0 0.0
        %1217 = vmatpush1.msra.mxu0 0.0
        %1218 = vmatprep.subr.mxu0 0.0
        %1219 = vmatpush1.msra.mxu0 0.0
        %1220 = vmatprep.subr.mxu0 0.0
        %1221 = vmatpush1.msra.mxu0 0.0
        %1222 = vmatprep.subr.mxu0 0.0
        %1223 = vmatpush1.msra.mxu0 0.0
        %1224 = vmatprep.subr.mxu0 0.0
        %1225 = vmatpush1.msra.mxu0 0.0
        %1226 = vmatprep.subr.mxu0 0.0
        %1227 = vmatpush1.msra.mxu0 0.0
        %1228 = vmatprep.subr.mxu0 0.0
        %1229 = vmatpush1.msra.mxu0 0.0
        %1230 = vmatprep.subr.mxu0 0.0
        %1231 = vmatpush1.msra.mxu0 0.0
        %1232 = vmatprep.subr.mxu0 0.0
        %1233 = vmatpush1.msra.mxu0 0.0
        %1234 = vmatprep.subr.mxu0 0.0
        %1235 = vmatpush1.msra.mxu0 0.0
        %1236 = vmatprep.subr.mxu0 0.0
        %1237 = vmatpush1.msra.mxu0 0.0
        %1238 = vmatprep.subr.mxu0 0.0
        %1239 = vmatpush1.msra.mxu0 0.0
        %1240 = vmatprep.subr.mxu0 0.0
        %1241 = vmatpush1.msra.mxu0 0.0
        %1242 = vmatprep.subr.mxu0 0.0
        %1243 = vmatpush1.msra.mxu0 0.0
        %1244 = vmatprep.subr.mxu0 0.0
        %1245 = vmatpush1.msra.mxu0 0.0
        %1246 = vmatprep.subr.mxu0 0.0
        %1247 = vmatpush1.msra.mxu0 0.0
        %1248 = vmatprep.subr.mxu0 0.0
        %1249 = vmatpush1.msra.mxu0 0.0
        %1250 = vmatprep.subr.mxu0 0.0
        %1251 = vmatpush1.msra.mxu0 0.0
        %1252 = vmatprep.subr.mxu0 0.0
        %1253 = vmatpush1.msra.mxu0 0.0
        %1254 = vmatprep.subr.mxu0 0.0
        %1255 = vmatpush1.msra.mxu0 0.0
        %1256 = vmatprep.subr.mxu0 0.0
        %1257 = vmatpush1.msra.mxu0 0.0
        %1258 = vmatprep.subr.mxu0 0.0
        %1259 = vmatpush1.msra.mxu0 0.0
        %1260 = vmatprep.subr.mxu0 0.0
        %1261 = vmatpush1.msra.mxu0 0.0
        %1262 = vmatprep.mubr.f32.mxu0 0.0
        %1263 = vmatmul.mubr.f32.gmra.mrb[0].mxu0 %v1103
        %v1264 = vpop.f32.mrb[0].mxu0
        %v1265 = vadd.f32 0.0, %v1264
        %v1266 = vpop.f32.mrb[0].mxu0
        %1267 = vmatprep.mubr.f32.mxu0 0.0
        %1268 = vmatmul.mubr.f32.gmra.mrb[0].mxu0 %v1106
        %v1269 = vpop.f32.mrb[0].mxu0
        %v1270 = vadd.f32 0.0, %v1269
        %v1271 = vpop.f32.mrb[0].mxu0
        %1272 = vmatprep.mubr.f32.mxu0 0.0
        %1273 = vmatmul.mubr.f32.gmra.mrb[0].mxu0 %v1109
        %v1274 = vpop.f32.mrb[0].mxu0
        %v1275 = vadd.f32 0.0, %v1274
        %v1276 = vpop.f32.mrb[0].mxu0
        %1277 = vmatprep.mubr.f32.mxu0 0.0
        %1278 = vmatmul.mubr.f32.gmra.mrb[0].mxu0 %v1112
        %v1279 = vpop.f32.mrb[0].mxu0
        %v1280 = vadd.f32 0.0, %v1279
        %v1281 = vpop.f32.mrb[0].mxu0
        %1282 = vmatprep.mubr.f32.mxu0 0.0
        %1283 = vmatmul.mubr.f32.gmra.mrb[0].mxu0 %v1115
        %v1284 = vpop.f32.mrb[0].mxu0
        %v1285 = vadd.f32 0.0, %v1284
        %v1286 = vpop.f32.mrb[0].mxu0
        %1287 = vmatprep.mubr.f32.mxu0 0.0
        %1288 = vmatmul.mubr.f32.gmra.mrb[0].mxu0 %v1118
        %v1289 = vpop.f32.mrb[0].mxu0
        %v1290 = vadd.f32 0.0, %v1289
        %v1291 = vpop.f32.mrb[0].mxu0
        %1292 = vmatprep.mubr.f32.mxu0 0.0
        %1293 = vmatmul.mubr.f32.gmra.mrb[0].mxu0 %v1121
        %v1294 = vpop.f32.mrb[0].mxu0
        %v1295 = vadd.f32 0.0, %v1294
        %v1296 = vpop.f32.mrb[0].mxu0
        %1297 = vmatprep.mubr.f32.mxu0 0.0
        %1298 = vmatmul.mubr.f32.gmra.mrb[0].mxu0 %v1124
        %v1299 = vpop.f32.mrb[0].mxu0
        %v1300 = vadd.f32 0.0, %v1299
        %v1301 = vpop.f32.mrb[0].mxu0
        %1302 = vmatprep.mubr.f32.mxu0 0.0
        %1303 = vmatmul.mubr.f32.gmra.mrb[0].mxu0 %v1127
        %v1304 = vpop.f32.mrb[0].mxu0
        %v1305 = vadd.f32 0.0, %v1304
        %v1306 = vpop.f32.mrb[0].mxu0
        %1307 = vmatprep.mubr.f32.mxu0 0.0
        %1308 = vmatmul.mubr.f32.gmra.mrb[0].mxu0 %v1130
        %v1309 = vpop.f32.mrb[0].mxu0
        %v1310 = vadd.f32 0.0, %v1309
        %v1311 = vpop.f32.mrb[0].mxu0
        %1312 = vmatprep.mubr.f32.mxu0 0.0
        %1313 = vmatmul.mubr.f32.gmra.mrb[0].mxu0 %v1133
        %v1314 = vpop.f32.mrb[0].mxu0
        %v1315 = vadd.f32 0.0, %v1314
        %v1316 = vpop.f32.mrb[0].mxu0
        %1317 = vmatprep.mubr.f32.mxu0 0.0
        %1318 = vmatmul.mubr.f32.gmra.mrb[0].mxu0 %v1136
        %v1319 = vpop.f32.mrb[0].mxu0
        %v1320 = vadd.f32 0.0, %v1319
        %v1321 = vpop.f32.mrb[0].mxu0
        %1322 = vmatprep.mubr.f32.mxu0 0.0
        %1323 = vmatmul.mubr.f32.gmra.mrb[0].mxu0 %v1139
        %v1324 = vpop.f32.mrb[0].mxu0
        %v1325 = vadd.f32 0.0, %v1324
        %v1326 = vpop.f32.mrb[0].mxu0
        %1327 = vmatprep.mubr.f32.mxu0 0.0
        %1328 = vmatmul.mubr.f32.gmra.mrb[0].mxu0 %v1142
        %v1329 = vpop.f32.mrb[0].mxu0
        %v1330 = vadd.f32 0.0, %v1329
        %v1331 = vpop.f32.mrb[0].mxu0
        %1332 = vmatprep.mubr.f32.mxu0 0.0
        %1333 = vmatmul.mubr.f32.gmra.mrb[0].mxu0 %v1145
        %v1334 = vpop.f32.mrb[0].mxu0
        %v1335 = vadd.f32 0.0, %v1334
        %v1336 = vpop.f32.mrb[0].mxu0
        %1337 = vmatprep.mubr.f32.mxu0 0.0
        %1338 = vmatmul.mubr.f32.gmra.mrb[0].mxu0 %v1148
        %v1339 = vpop.f32.mrb[0].mxu0
        %v1340 = vadd.f32 0.0, %v1339
        %v1341 = vpop.f32.mrb[0].mxu0
        %1342 = vmatprep.mubr.f32.mxu0 0.0
        %1343 = vmatmul.mubr.f32.gmra.mrb[0].mxu0 %v1151
        %v1344 = vpop.f32.mrb[0].mxu0
        %v1345 = vadd.f32 0.0, %v1344
        %v1346 = vpop.f32.mrb[0].mxu0
        %1347 = vmatprep.mubr.f32.mxu0 0.0
        %1348 = vmatmul.mubr.f32.gmra.mrb[0].mxu0 %v1154
        %v1349 = vpop.f32.mrb[0].mxu0
        %v1350 = vadd.f32 0.0, %v1349
        %v1351 = vpop.f32.mrb[0].mxu0
        %1352 = vmatprep.mubr.f32.mxu0 0.0
        %1353 = vmatmul.mubr.f32.gmra.mrb[0].mxu0 %v1157
        %v1354 = vpop.f32.mrb[0].mxu0
        %v1355 = vadd.f32 0.0, %v1354
        %v1356 = vpop.f32.mrb[0].mxu0
        %1357 = vmatprep.mubr.f32.mxu0 0.0
        %1358 = vmatmul.mubr.f32.gmra.mrb[0].mxu0 %v1160
        %v1359 = vpop.f32.mrb[0].mxu0
        %v1360 = vadd.f32 0.0, %v1359
        %v1361 = vpop.f32.mrb[0].mxu0
        %1362 = vmatprep.mubr.f32.mxu0 0.0
        %1363 = vmatmul.mubr.f32.gmra.mrb[0].mxu0 %v1163
        %v1364 = vpop.f32.mrb[0].mxu0
        %v1365 = vadd.f32 0.0, %v1364
        %v1366 = vpop.f32.mrb[0].mxu0
        %1367 = vmatprep.mubr.f32.mxu0 0.0
        %1368 = vmatmul.mubr.f32.gmra.mrb[0].mxu0 %v1166
        %v1369 = vpop.f32.mrb[0].mxu0
        %v1370 = vadd.f32 0.0, %v1369
        %v1371 = vpop.f32.mrb[0].mxu0
        %1372 = vmatprep.mubr.f32.mxu0 0.0
        %1373 = vmatmul.mubr.f32.gmra.mrb[0].mxu0 %v1169
        %v1374 = vpop.f32.mrb[0].mxu0
        %v1375 = vadd.f32 0.0, %v1374
        %v1376 = vpop.f32.mrb[0].mxu0
        %1377 = vmatprep.mubr.f32.mxu0 0.0
        %1378 = vmatmul.mubr.f32.gmra.mrb[0].mxu0 %v1172
        %v1379 = vpop.f32.mrb[0].mxu0
        %v1380 = vadd.f32 0.0, %v1379
        %v1381 = vpop.f32.mrb[0].mxu0
        %1382 = vmatprep.mubr.f32.mxu0 0.0
        %1383 = vmatmul.mubr.f32.gmra.mrb[0].mxu0 %v1175
        %v1384 = vpop.f32.mrb[0].mxu0
        %v1385 = vadd.f32 0.0, %v1384
        %v1386 = vpop.f32.mrb[0].mxu0
        %1387 = vmatprep.mubr.f32.mxu0 0.0
        %1388 = vmatmul.mubr.f32.gmra.mrb[0].mxu0 %v1178
        %v1389 = vpop.f32.mrb[0].mxu0
        %v1390 = vadd.f32 0.0, %v1389
        %v1391 = vpop.f32.mrb[0].mxu0
        %1392 = vmatprep.mubr.f32.mxu0 0.0
        %1393 = vmatmul.mubr.f32.gmra.mrb[0].mxu0 %v1181
        %v1394 = vpop.f32.mrb[0].mxu0
        %v1395 = vadd.f32 0.0, %v1394
        %v1396 = vpop.f32.mrb[0].mxu0
        %1397 = vmatprep.mubr.f32.mxu0 0.0
        %1398 = vmatmul.mubr.f32.gmra.mrb[0].mxu0 %v1184
        %v1399 = vpop.f32.mrb[0].mxu0
        %v1400 = vadd.f32 0.0, %v1399
        %v1401 = vpop.f32.mrb[0].mxu0
        %1402 = vmatprep.mubr.f32.mxu0 0.0
        %1403 = vmatmul.mubr.f32.gmra.mrb[0].mxu0 %v1187
        %v1404 = vpop.f32.mrb[0].mxu0
        %v1405 = vadd.f32 0.0, %v1404
        %v1406 = vpop.f32.mrb[0].mxu0
        %1407 = vmatprep.mubr.f32.mxu0 0.0
        %1408 = vmatmul.mubr.f32.gmra.mrb[0].mxu0 %v1190
        %v1409 = vpop.f32.mrb[0].mxu0
        %v1410 = vadd.f32 0.0, %v1409
        %v1411 = vpop.f32.mrb[0].mxu0
        %1412 = vmatprep.mubr.f32.mxu0 0.0
        %1413 = vmatmul.mubr.f32.gmra.mrb[0].mxu0 %v1193
        %v1414 = vpop.f32.mrb[0].mxu0
        %v1415 = vadd.f32 0.0, %v1414
        %v1416 = vpop.f32.mrb[0].mxu0
        %1417 = vmatprep.mubr.f32.mxu0 0.0
        %1418 = vmatmul.mubr.f32.gmra.mrb[0].mxu0 %v1196
        %v1419 = vpop.f32.mrb[0].mxu0
        %v1420 = vadd.f32 0.0, %v1419
        %v1421 = vpop.f32.mrb[0].mxu0
        %1422 = vdwg.mxu0
        %v1423 = vmul.f32 %v1265, %v307
        %v1424 = vmul.f32 %v1270, %v308
        %v1425 = vmul.f32 %v1275, %v309
        %v1426 = vmul.f32 %v1280, %v310
        %v1427 = vmul.f32 %v1285, %v311
        %v1428 = vmul.f32 %v1290, %v312
        %v1429 = vmul.f32 %v1295, %v313
        %v1430 = vmul.f32 %v1300, %v314
        %v1431 = vmul.f32 %v1305, %v315
        %v1432 = vmul.f32 %v1310, %v316
        %v1433 = vmul.f32 %v1315, %v317
        %v1434 = vmul.f32 %v1320, %v318
        %v1435 = vmul.f32 %v1325, %v319
        %v1436 = vmul.f32 %v1330, %v320
        %v1437 = vmul.f32 %v1335, %v321
        %v1438 = vmul.f32 %v1340, %v322
        %v1439 = vmul.f32 %v1345, %v323
        %v1440 = vmul.f32 %v1350, %v324
        %v1441 = vmul.f32 %v1355, %v325
        %v1442 = vmul.f32 %v1360, %v326
        %v1443 = vmul.f32 %v1365, %v327
        %v1444 = vmul.f32 %v1370, %v328
        %v1445 = vmul.f32 %v1375, %v329
        %v1446 = vmul.f32 %v1380, %v330
        %v1447 = vmul.f32 %v1385, %v331
        %v1448 = vmul.f32 %v1390, %v332
        %v1449 = vmul.f32 %v1395, %v333
        %v1450 = vmul.f32 %v1400, %v334
        %v1451 = vmul.f32 %v1405, %v335
        %v1452 = vmul.f32 %v1410, %v336
        %v1453 = vmul.f32 %v1415, %v337
        %v1454 = vmul.f32 %v1420, %v338
        %v1455 = vld [vmem:[%s5] sm:$0xff]
        %v1456 = vld [vmem:[%s5 + $0x8] sm:$0xff]
        %v1457 = vld [vmem:[%s5 + $0x10] sm:$0xff]
        %v1458 = vld [vmem:[%s5 + $0x18] sm:$0xff]
        %v1459 = vld [vmem:[%s5 + $0x20] sm:$0xff]
        %v1460 = vld [vmem:[%s5 + $0x28] sm:$0xff]
        %v1461 = vld [vmem:[%s5 + $0x30] sm:$0xff]
        %v1462 = vld [vmem:[%s5 + $0x38] sm:$0xff]
        %v1463 = vld [vmem:[%s5 + $0x40] sm:$0xff]
        %v1464 = vld [vmem:[%s5 + $0x48] sm:$0xff]
        %v1465 = vld [vmem:[%s5 + $0x50] sm:$0xff]
        %v1466 = vld [vmem:[%s5 + $0x58] sm:$0xff]
        %v1467 = vld [vmem:[%s5 + $0x60] sm:$0xff]
        %v1468 = vld [vmem:[%s5 + $0x68] sm:$0xff]
        %v1469 = vld [vmem:[%s5 + $0x70] sm:$0xff]
        %v1470 = vld [vmem:[%s5 + $0x78] sm:$0xff]
        %1471 = vmatprep.subr.mxu0 0.0
        %1472 = vmatpush1.msra.mxu0 %v1455
        %1473 = vmatprep.subr.mxu0 0.0
        %1474 = vmatpush1.msra.mxu0 %v1456
        %1475 = vmatprep.subr.mxu0 0.0
        %1476 = vmatpush1.msra.mxu0 %v1457
        %1477 = vmatprep.subr.mxu0 0.0
        %1478 = vmatpush1.msra.mxu0 %v1458
        %1479 = vmatprep.subr.mxu0 0.0
        %1480 = vmatpush1.msra.mxu0 %v1459
        %1481 = vmatprep.subr.mxu0 0.0
        %1482 = vmatpush1.msra.mxu0 %v1460
        %1483 = vmatprep.subr.mxu0 0.0
        %1484 = vmatpush1.msra.mxu0 %v1461
        %1485 = vmatprep.subr.mxu0 0.0
        %1486 = vmatpush1.msra.mxu0 %v1462
        %1487 = vmatprep.subr.mxu0 0.0
        %1488 = vmatpush1.msra.mxu0 %v1463
        %1489 = vmatprep.subr.mxu0 0.0
        %1490 = vmatpush1.msra.mxu0 %v1464
        %1491 = vmatprep.subr.mxu0 0.0
        %1492 = vmatpush1.msra.mxu0 %v1465
        %1493 = vmatprep.subr.mxu0 0.0
        %1494 = vmatpush1.msra.mxu0 %v1466
        %1495 = vmatprep.subr.mxu0 0.0
        %1496 = vmatpush1.msra.mxu0 %v1467
        %1497 = vmatprep.subr.mxu0 0.0
        %1498 = vmatpush1.msra.mxu0 %v1468
        %1499 = vmatprep.subr.mxu0 0.0
        %1500 = vmatpush1.msra.mxu0 %v1469
        %1501 = vmatprep.subr.mxu0 0.0
        %1502 = vmatpush1.msra.mxu0 %v1470
        %1503 = vmatprep.subr.mxu0 0.0
        %1504 = vmatpush1.msra.mxu0 0.0
        %1505 = vmatprep.subr.mxu0 0.0
        %1506 = vmatpush1.msra.mxu0 0.0
        %1507 = vmatprep.subr.mxu0 0.0
        %1508 = vmatpush1.msra.mxu0 0.0
        %1509 = vmatprep.subr.mxu0 0.0
        %1510 = vmatpush1.msra.mxu0 0.0
        %1511 = vmatprep.subr.mxu0 0.0
        %1512 = vmatpush1.msra.mxu0 0.0
        %1513 = vmatprep.subr.mxu0 0.0
        %1514 = vmatpush1.msra.mxu0 0.0
        %1515 = vmatprep.subr.mxu0 0.0
        %1516 = vmatpush1.msra.mxu0 0.0
        %1517 = vmatprep.subr.mxu0 0.0
        %1518 = vmatpush1.msra.mxu0 0.0
        %1519 = vmatprep.subr.mxu0 0.0
        %1520 = vmatpush1.msra.mxu0 0.0
        %1521 = vmatprep.subr.mxu0 0.0
        %1522 = vmatpush1.msra.mxu0 0.0
        %1523 = vmatprep.subr.mxu0 0.0
        %1524 = vmatpush1.msra.mxu0 0.0
        %1525 = vmatprep.subr.mxu0 0.0
        %1526 = vmatpush1.msra.mxu0 0.0
        %1527 = vmatprep.subr.mxu0 0.0
        %1528 = vmatpush1.msra.mxu0 0.0
        %1529 = vmatprep.subr.mxu0 0.0
        %1530 = vmatpush1.msra.mxu0 0.0
        %1531 = vmatprep.subr.mxu0 0.0
        %1532 = vmatpush1.msra.mxu0 0.0
        %1533 = vmatprep.subr.mxu0 0.0
        %1534 = vmatpush1.msra.mxu0 0.0
        %1535 = vmatprep.mubr.f32.mxu0 0.0
        %1536 = vmatmul.mubr.f32.gmra.mrb[0].mxu0 %v1423
        %v1537 = vpop.f32.mrb[0].mxu0
        %v1538 = vadd.f32 0.0, %v1537
        %v1539 = vpop.f32.mrb[0].mxu0
        %1540 = vmatprep.mubr.f32.mxu0 0.0
        %1541 = vmatmul.mubr.f32.gmra.mrb[0].mxu0 %v1424
        %v1542 = vpop.f32.mrb[0].mxu0
        %v1543 = vadd.f32 0.0, %v1542
        %v1544 = vpop.f32.mrb[0].mxu0
        %1545 = vmatprep.mubr.f32.mxu0 0.0
        %1546 = vmatmul.mubr.f32.gmra.mrb[0].mxu0 %v1425
        %v1547 = vpop.f32.mrb[0].mxu0
        %v1548 = vadd.f32 0.0, %v1547
        %v1549 = vpop.f32.mrb[0].mxu0
        %1550 = vmatprep.mubr.f32.mxu0 0.0
        %1551 = vmatmul.mubr.f32.gmra.mrb[0].mxu0 %v1426
        %v1552 = vpop.f32.mrb[0].mxu0
        %v1553 = vadd.f32 0.0, %v1552
        %v1554 = vpop.f32.mrb[0].mxu0
        %1555 = vmatprep.mubr.f32.mxu0 0.0
        %1556 = vmatmul.mubr.f32.gmra.mrb[0].mxu0 %v1427
        %v1557 = vpop.f32.mrb[0].mxu0
        %v1558 = vadd.f32 0.0, %v1557
        %v1559 = vpop.f32.mrb[0].mxu0
        %1560 = vmatprep.mubr.f32.mxu0 0.0
        %1561 = vmatmul.mubr.f32.gmra.mrb[0].mxu0 %v1428
        %v1562 = vpop.f32.mrb[0].mxu0
        %v1563 = vadd.f32 0.0, %v1562
        %v1564 = vpop.f32.mrb[0].mxu0
        %1565 = vmatprep.mubr.f32.mxu0 0.0
        %1566 = vmatmul.mubr.f32.gmra.mrb[0].mxu0 %v1429
        %v1567 = vpop.f32.mrb[0].mxu0
        %v1568 = vadd.f32 0.0, %v1567
        %v1569 = vpop.f32.mrb[0].mxu0
        %1570 = vmatprep.mubr.f32.mxu0 0.0
        %1571 = vmatmul.mubr.f32.gmra.mrb[0].mxu0 %v1430
        %v1572 = vpop.f32.mrb[0].mxu0
        %v1573 = vadd.f32 0.0, %v1572
        %v1574 = vpop.f32.mrb[0].mxu0
        %1575 = vmatprep.mubr.f32.mxu0 0.0
        %1576 = vmatmul.mubr.f32.gmra.mrb[0].mxu0 %v1431
        %v1577 = vpop.f32.mrb[0].mxu0
        %v1578 = vadd.f32 0.0, %v1577
        %v1579 = vpop.f32.mrb[0].mxu0
        %1580 = vmatprep.mubr.f32.mxu0 0.0
        %1581 = vmatmul.mubr.f32.gmra.mrb[0].mxu0 %v1432
        %v1582 = vpop.f32.mrb[0].mxu0
        %v1583 = vadd.f32 0.0, %v1582
        %v1584 = vpop.f32.mrb[0].mxu0
        %1585 = vmatprep.mubr.f32.mxu0 0.0
        %1586 = vmatmul.mubr.f32.gmra.mrb[0].mxu0 %v1433
        %v1587 = vpop.f32.mrb[0].mxu0
        %v1588 = vadd.f32 0.0, %v1587
        %v1589 = vpop.f32.mrb[0].mxu0
        %1590 = vmatprep.mubr.f32.mxu0 0.0
        %1591 = vmatmul.mubr.f32.gmra.mrb[0].mxu0 %v1434
        %v1592 = vpop.f32.mrb[0].mxu0
        %v1593 = vadd.f32 0.0, %v1592
        %v1594 = vpop.f32.mrb[0].mxu0
        %1595 = vmatprep.mubr.f32.mxu0 0.0
        %1596 = vmatmul.mubr.f32.gmra.mrb[0].mxu0 %v1435
        %v1597 = vpop.f32.mrb[0].mxu0
        %v1598 = vadd.f32 0.0, %v1597
        %v1599 = vpop.f32.mrb[0].mxu0
        %1600 = vmatprep.mubr.f32.mxu0 0.0
        %1601 = vmatmul.mubr.f32.gmra.mrb[0].mxu0 %v1436
        %v1602 = vpop.f32.mrb[0].mxu0
        %v1603 = vadd.f32 0.0, %v1602
        %v1604 = vpop.f32.mrb[0].mxu0
        %1605 = vmatprep.mubr.f32.mxu0 0.0
        %1606 = vmatmul.mubr.f32.gmra.mrb[0].mxu0 %v1437
        %v1607 = vpop.f32.mrb[0].mxu0
        %v1608 = vadd.f32 0.0, %v1607
        %v1609 = vpop.f32.mrb[0].mxu0
        %1610 = vmatprep.mubr.f32.mxu0 0.0
        %1611 = vmatmul.mubr.f32.gmra.mrb[0].mxu0 %v1438
        %v1612 = vpop.f32.mrb[0].mxu0
        %v1613 = vadd.f32 0.0, %v1612
        %v1614 = vpop.f32.mrb[0].mxu0
        %1615 = vmatprep.mubr.f32.mxu0 0.0
        %1616 = vmatmul.mubr.f32.gmra.mrb[0].mxu0 %v1439
        %v1617 = vpop.f32.mrb[0].mxu0
        %v1618 = vadd.f32 0.0, %v1617
        %v1619 = vpop.f32.mrb[0].mxu0
        %1620 = vmatprep.mubr.f32.mxu0 0.0
        %1621 = vmatmul.mubr.f32.gmra.mrb[0].mxu0 %v1440
        %v1622 = vpop.f32.mrb[0].mxu0
        %v1623 = vadd.f32 0.0, %v1622
        %v1624 = vpop.f32.mrb[0].mxu0
        %1625 = vmatprep.mubr.f32.mxu0 0.0
        %1626 = vmatmul.mubr.f32.gmra.mrb[0].mxu0 %v1441
        %v1627 = vpop.f32.mrb[0].mxu0
        %v1628 = vadd.f32 0.0, %v1627
        %v1629 = vpop.f32.mrb[0].mxu0
        %1630 = vmatprep.mubr.f32.mxu0 0.0
        %1631 = vmatmul.mubr.f32.gmra.mrb[0].mxu0 %v1442
        %v1632 = vpop.f32.mrb[0].mxu0
        %v1633 = vadd.f32 0.0, %v1632
        %v1634 = vpop.f32.mrb[0].mxu0
        %1635 = vmatprep.mubr.f32.mxu0 0.0
        %1636 = vmatmul.mubr.f32.gmra.mrb[0].mxu0 %v1443
        %v1637 = vpop.f32.mrb[0].mxu0
        %v1638 = vadd.f32 0.0, %v1637
        %v1639 = vpop.f32.mrb[0].mxu0
        %1640 = vmatprep.mubr.f32.mxu0 0.0
        %1641 = vmatmul.mubr.f32.gmra.mrb[0].mxu0 %v1444
        %v1642 = vpop.f32.mrb[0].mxu0
        %v1643 = vadd.f32 0.0, %v1642
        %v1644 = vpop.f32.mrb[0].mxu0
        %1645 = vmatprep.mubr.f32.mxu0 0.0
        %1646 = vmatmul.mubr.f32.gmra.mrb[0].mxu0 %v1445
        %v1647 = vpop.f32.mrb[0].mxu0
        %v1648 = vadd.f32 0.0, %v1647
        %v1649 = vpop.f32.mrb[0].mxu0
        %1650 = vmatprep.mubr.f32.mxu0 0.0
        %1651 = vmatmul.mubr.f32.gmra.mrb[0].mxu0 %v1446
        %v1652 = vpop.f32.mrb[0].mxu0
        %v1653 = vadd.f32 0.0, %v1652
        %v1654 = vpop.f32.mrb[0].mxu0
        %1655 = vmatprep.mubr.f32.mxu0 0.0
        %1656 = vmatmul.mubr.f32.gmra.mrb[0].mxu0 %v1447
        %v1657 = vpop.f32.mrb[0].mxu0
        %v1658 = vadd.f32 0.0, %v1657
        %v1659 = vpop.f32.mrb[0].mxu0
        %1660 = vmatprep.mubr.f32.mxu0 0.0
        %1661 = vmatmul.mubr.f32.gmra.mrb[0].mxu0 %v1448
        %v1662 = vpop.f32.mrb[0].mxu0
        %v1663 = vadd.f32 0.0, %v1662
        %v1664 = vpop.f32.mrb[0].mxu0
        %1665 = vmatprep.mubr.f32.mxu0 0.0
        %1666 = vmatmul.mubr.f32.gmra.mrb[0].mxu0 %v1449
        %v1667 = vpop.f32.mrb[0].mxu0
        %v1668 = vadd.f32 0.0, %v1667
        %v1669 = vpop.f32.mrb[0].mxu0
        %1670 = vmatprep.mubr.f32.mxu0 0.0
        %1671 = vmatmul.mubr.f32.gmra.mrb[0].mxu0 %v1450
        %v1672 = vpop.f32.mrb[0].mxu0
        %v1673 = vadd.f32 0.0, %v1672
        %v1674 = vpop.f32.mrb[0].mxu0
        %1675 = vmatprep.mubr.f32.mxu0 0.0
        %1676 = vmatmul.mubr.f32.gmra.mrb[0].mxu0 %v1451
        %v1677 = vpop.f32.mrb[0].mxu0
        %v1678 = vadd.f32 0.0, %v1677
        %v1679 = vpop.f32.mrb[0].mxu0
        %1680 = vmatprep.mubr.f32.mxu0 0.0
        %1681 = vmatmul.mubr.f32.gmra.mrb[0].mxu0 %v1452
        %v1682 = vpop.f32.mrb[0].mxu0
        %v1683 = vadd.f32 0.0, %v1682
        %v1684 = vpop.f32.mrb[0].mxu0
        %1685 = vmatprep.mubr.f32.mxu0 0.0
        %1686 = vmatmul.mubr.f32.gmra.mrb[0].mxu0 %v1453
        %v1687 = vpop.f32.mrb[0].mxu0
        %v1688 = vadd.f32 0.0, %v1687
        %v1689 = vpop.f32.mrb[0].mxu0
        %1690 = vmatprep.mubr.f32.mxu0 0.0
        %1691 = vmatmul.mubr.f32.gmra.mrb[0].mxu0 %v1454
        %v1692 = vpop.f32.mrb[0].mxu0
        %v1693 = vadd.f32 0.0, %v1692
        %v1694 = vpop.f32.mrb[0].mxu0
        %1695 = vdwg.mxu0
        %v1696 = vxor.u32 %v1538, 2147483648
        %v1697 = vxor.u32 %v1543, 2147483648
        %v1698 = vxor.u32 %v1548, 2147483648
        %v1699 = vxor.u32 %v1553, 2147483648
        %v1700 = vxor.u32 %v1558, 2147483648
        %v1701 = vxor.u32 %v1563, 2147483648
        %v1702 = vxor.u32 %v1568, 2147483648
        %v1703 = vxor.u32 %v1573, 2147483648
        %v1704 = vxor.u32 %v1578, 2147483648
        %v1705 = vxor.u32 %v1583, 2147483648
        %v1706 = vxor.u32 %v1588, 2147483648
        %v1707 = vxor.u32 %v1593, 2147483648
        %v1708 = vxor.u32 %v1598, 2147483648
        %v1709 = vxor.u32 %v1603, 2147483648
        %v1710 = vxor.u32 %v1608, 2147483648
        %v1711 = vxor.u32 %v1613, 2147483648
        %v1712 = vxor.u32 %v1618, 2147483648
        %v1713 = vxor.u32 %v1623, 2147483648
        %v1714 = vxor.u32 %v1628, 2147483648
        %v1715 = vxor.u32 %v1633, 2147483648
        %v1716 = vxor.u32 %v1638, 2147483648
        %v1717 = vxor.u32 %v1643, 2147483648
        %v1718 = vxor.u32 %v1648, 2147483648
        %v1719 = vxor.u32 %v1653, 2147483648
        %v1720 = vxor.u32 %v1658, 2147483648
        %v1721 = vxor.u32 %v1663, 2147483648
        %v1722 = vxor.u32 %v1668, 2147483648
        %v1723 = vxor.u32 %v1673, 2147483648
        %v1724 = vxor.u32 %v1678, 2147483648
        %v1725 = vxor.u32 %v1683, 2147483648
        %v1726 = vxor.u32 %v1688, 2147483648
        %v1727 = vxor.u32 %v1693, 2147483648
        %v1728 = vmul.f32 %v1696, 1.442695
        %v1729 = vpow.pop %v1728
        %v1730 = vmul.f32 %v1697, 1.442695
        %v1731 = vpow.pop %v1730
        %v1732 = vmul.f32 %v1698, 1.442695
        %v1733 = vpow.pop %v1732
        %v1734 = vmul.f32 %v1699, 1.442695
        %v1735 = vpow.pop %v1734
        %v1736 = vmul.f32 %v1700, 1.442695
        %v1737 = vpow.pop %v1736
        %v1738 = vmul.f32 %v1701, 1.442695
        %v1739 = vpow.pop %v1738
        %v1740 = vmul.f32 %v1702, 1.442695
        %v1741 = vpow.pop %v1740
        %v1742 = vmul.f32 %v1703, 1.442695
        %v1743 = vpow.pop %v1742
        %v1744 = vmul.f32 %v1704, 1.442695
        %v1745 = vpow.pop %v1744
        %v1746 = vmul.f32 %v1705, 1.442695
        %v1747 = vpow.pop %v1746
        %v1748 = vmul.f32 %v1706, 1.442695
        %v1749 = vpow.pop %v1748
        %v1750 = vmul.f32 %v1707, 1.442695
        %v1751 = vpow.pop %v1750
        %v1752 = vmul.f32 %v1708, 1.442695
        %v1753 = vpow.pop %v1752
        %v1754 = vmul.f32 %v1709, 1.442695
        %v1755 = vpow.pop %v1754
        %v1756 = vmul.f32 %v1710, 1.442695
        %v1757 = vpow.pop %v1756
        %v1758 = vmul.f32 %v1711, 1.442695
        %v1759 = vpow.pop %v1758
        %v1760 = vmul.f32 %v1712, 1.442695
        %v1761 = vpow.pop %v1760
        %v1762 = vmul.f32 %v1713, 1.442695
        %v1763 = vpow.pop %v1762
        %v1764 = vmul.f32 %v1714, 1.442695
        %v1765 = vpow.pop %v1764
        %v1766 = vmul.f32 %v1715, 1.442695
        %v1767 = vpow.pop %v1766
        %v1768 = vmul.f32 %v1716, 1.442695
        %v1769 = vpow.pop %v1768
        %v1770 = vmul.f32 %v1717, 1.442695
        %v1771 = vpow.pop %v1770
        %v1772 = vmul.f32 %v1718, 1.442695
        %v1773 = vpow.pop %v1772
        %v1774 = vmul.f32 %v1719, 1.442695
        %v1775 = vpow.pop %v1774
        %v1776 = vmul.f32 %v1720, 1.442695
        %v1777 = vpow.pop %v1776
        %v1778 = vmul.f32 %v1721, 1.442695
        %v1779 = vpow.pop %v1778
        %v1780 = vmul.f32 %v1722, 1.442695
        %v1781 = vpow.pop %v1780
        %v1782 = vmul.f32 %v1723, 1.442695
        %v1783 = vpow.pop %v1782
        %v1784 = vmul.f32 %v1724, 1.442695
        %v1785 = vpow.pop %v1784
        %v1786 = vmul.f32 %v1725, 1.442695
        %v1787 = vpow.pop %v1786
        %v1788 = vmul.f32 %v1726, 1.442695
        %v1789 = vpow.pop %v1788
        %v1790 = vmul.f32 %v1727, 1.442695
        %v1791 = vpow.pop %v1790
        %v1792 = vadd.f32 %v1729, 1.0
        %v1793 = vadd.f32 %v1731, 1.0
        %v1794 = vadd.f32 %v1733, 1.0
        %v1795 = vadd.f32 %v1735, 1.0
        %v1796 = vadd.f32 %v1737, 1.0
        %v1797 = vadd.f32 %v1739, 1.0
        %v1798 = vadd.f32 %v1741, 1.0
        %v1799 = vadd.f32 %v1743, 1.0
        %v1800 = vadd.f32 %v1745, 1.0
        %v1801 = vadd.f32 %v1747, 1.0
        %v1802 = vadd.f32 %v1749, 1.0
        %v1803 = vadd.f32 %v1751, 1.0
        %v1804 = vadd.f32 %v1753, 1.0
        %v1805 = vadd.f32 %v1755, 1.0
        %v1806 = vadd.f32 %v1757, 1.0
        %v1807 = vadd.f32 %v1759, 1.0
        %v1808 = vadd.f32 %v1761, 1.0
        %v1809 = vadd.f32 %v1763, 1.0
        %v1810 = vadd.f32 %v1765, 1.0
        %v1811 = vadd.f32 %v1767, 1.0
        %v1812 = vadd.f32 %v1769, 1.0
        %v1813 = vadd.f32 %v1771, 1.0
        %v1814 = vadd.f32 %v1773, 1.0
        %v1815 = vadd.f32 %v1775, 1.0
        %v1816 = vadd.f32 %v1777, 1.0
        %v1817 = vadd.f32 %v1779, 1.0
        %v1818 = vadd.f32 %v1781, 1.0
        %v1819 = vadd.f32 %v1783, 1.0
        %v1820 = vadd.f32 %v1785, 1.0
        %v1821 = vadd.f32 %v1787, 1.0
        %v1822 = vadd.f32 %v1789, 1.0
        %v1823 = vadd.f32 %v1791, 1.0
        %v1824 = vrcp.pop %v1792
        %v1825 = vmul.f32 1.0, %v1824
        %v1826 = vrcp.pop %v1793
        %v1827 = vmul.f32 1.0, %v1826
        %v1828 = vrcp.pop %v1794
        %v1829 = vmul.f32 1.0, %v1828
        %v1830 = vrcp.pop %v1795
        %v1831 = vmul.f32 1.0, %v1830
        %v1832 = vrcp.pop %v1796
        %v1833 = vmul.f32 1.0, %v1832
        %v1834 = vrcp.pop %v1797
        %v1835 = vmul.f32 1.0, %v1834
        %v1836 = vrcp.pop %v1798
        %v1837 = vmul.f32 1.0, %v1836
        %v1838 = vrcp.pop %v1799
        %v1839 = vmul.f32 1.0, %v1838
        %v1840 = vrcp.pop %v1800
        %v1841 = vmul.f32 1.0, %v1840
        %v1842 = vrcp.pop %v1801
        %v1843 = vmul.f32 1.0, %v1842
        %v1844 = vrcp.pop %v1802
        %v1845 = vmul.f32 1.0, %v1844
        %v1846 = vrcp.pop %v1803
        %v1847 = vmul.f32 1.0, %v1846
        %v1848 = vrcp.pop %v1804
        %v1849 = vmul.f32 1.0, %v1848
        %v1850 = vrcp.pop %v1805
        %v1851 = vmul.f32 1.0, %v1850
        %v1852 = vrcp.pop %v1806
        %v1853 = vmul.f32 1.0, %v1852
        %v1854 = vrcp.pop %v1807
        %v1855 = vmul.f32 1.0, %v1854
        %v1856 = vrcp.pop %v1808
        %v1857 = vmul.f32 1.0, %v1856
        %v1858 = vrcp.pop %v1809
        %v1859 = vmul.f32 1.0, %v1858
        %v1860 = vrcp.pop %v1810
        %v1861 = vmul.f32 1.0, %v1860
        %v1862 = vrcp.pop %v1811
        %v1863 = vmul.f32 1.0, %v1862
        %v1864 = vrcp.pop %v1812
        %v1865 = vmul.f32 1.0, %v1864
        %v1866 = vrcp.pop %v1813
        %v1867 = vmul.f32 1.0, %v1866
        %v1868 = vrcp.pop %v1814
        %v1869 = vmul.f32 1.0, %v1868
        %v1870 = vrcp.pop %v1815
        %v1871 = vmul.f32 1.0, %v1870
        %v1872 = vrcp.pop %v1816
        %v1873 = vmul.f32 1.0, %v1872
        %v1874 = vrcp.pop %v1817
        %v1875 = vmul.f32 1.0, %v1874
        %v1876 = vrcp.pop %v1818
        %v1877 = vmul.f32 1.0, %v1876
        %v1878 = vrcp.pop %v1819
        %v1879 = vmul.f32 1.0, %v1878
        %v1880 = vrcp.pop %v1820
        %v1881 = vmul.f32 1.0, %v1880
        %v1882 = vrcp.pop %v1821
        %v1883 = vmul.f32 1.0, %v1882
        %v1884 = vrcp.pop %v1822
        %v1885 = vmul.f32 1.0, %v1884
        %v1886 = vrcp.pop %v1823
        %v1887 = vmul.f32 1.0, %v1886
        %1888 = vst [vmem:[%s261] sm:$0xff] %v1825
        %1889 = vst [vmem:[%s261 + $0x8] sm:$0xff] %v1827
        %1890 = vst [vmem:[%s261 + $0x10] sm:$0xff] %v1829
        %1891 = vst [vmem:[%s261 + $0x18] sm:$0xff] %v1831
        %1892 = vst [vmem:[%s261 + $0x20] sm:$0xff] %v1833
        %1893 = vst [vmem:[%s261 + $0x28] sm:$0xff] %v1835
        %1894 = vst [vmem:[%s261 + $0x30] sm:$0xff] %v1837
        %1895 = vst [vmem:[%s261 + $0x38] sm:$0xff] %v1839
        %1896 = vst [vmem:[%s261 + $0x40] sm:$0xff] %v1841
        %1897 = vst [vmem:[%s261 + $0x48] sm:$0xff] %v1843
        %1898 = vst [vmem:[%s261 + $0x50] sm:$0xff] %v1845
        %1899 = vst [vmem:[%s261 + $0x58] sm:$0xff] %v1847
        %1900 = vst [vmem:[%s261 + $0x60] sm:$0xff] %v1849
        %1901 = vst [vmem:[%s261 + $0x68] sm:$0xff] %v1851
        %1902 = vst [vmem:[%s261 + $0x70] sm:$0xff] %v1853
        %1903 = vst [vmem:[%s261 + $0x78] sm:$0xff] %v1855
        %1904 = vst [vmem:[%s261 + $0x80] sm:$0xff] %v1857
        %1905 = vst [vmem:[%s261 + $0x88] sm:$0xff] %v1859
        %1906 = vst [vmem:[%s261 + $0x90] sm:$0xff] %v1861
        %1907 = vst [vmem:[%s261 + $0x98] sm:$0xff] %v1863
        %1908 = vst [vmem:[%s261 + $0xa0] sm:$0xff] %v1865
        %1909 = vst [vmem:[%s261 + $0xa8] sm:$0xff] %v1867
        %1910 = vst [vmem:[%s261 + $0xb0] sm:$0xff] %v1869
        %1911 = vst [vmem:[%s261 + $0xb8] sm:$0xff] %v1871
        %1912 = vst [vmem:[%s261 + $0xc0] sm:$0xff] %v1873
        %1913 = vst [vmem:[%s261 + $0xc8] sm:$0xff] %v1875
        %1914 = vst [vmem:[%s261 + $0xd0] sm:$0xff] %v1877
        %1915 = vst [vmem:[%s261 + $0xd8] sm:$0xff] %v1879
        %1916 = vst [vmem:[%s261 + $0xe0] sm:$0xff] %v1881
        %1917 = vst [vmem:[%s261 + $0xe8] sm:$0xff] %v1883
        %1918 = vst [vmem:[%s261 + $0xf0] sm:$0xff] %v1885
        %1919 = vst [vmem:[%s261 + $0xf8] sm:$0xff] %v1887
        %s1920 = sand.u32 %s164, 1
        %s1921 = scalar_lea.sflag [#allocation3], %s1920
        %s1922 = sand.u32 %s164, 1
        %s1923 = smul.addr %s1922, 256
        %s1924 = scalar_lea.vmem [#allocation2], %s1923
        // Predicated region
        $region45: #{tpu_custom_call.1} parent=43 // pred_check
          %p1925 = pneg %p174
        $region46: #{tpu_custom_call.1} parent=43 // pred_check_branch
          %1927 = sbr.rel (%p1925) target = $region48
        $region47: #{tpu_custom_call.1} parent=43 // pred_region
          %s1928 = smul.u32 32, %s20
          %s1930 = ssub.s32 4096, 4096
          %1931 = vsyncadd %s1921, %s1930
          %s1932 = smul.addr %s1928, 128
          %s1933 = scalar_lea.hbm %s6, %s1932
          %s1934 = sshll.u32 %s1924, 4
          %s1935 = int_to_ptr.vmem [resolvable:$true] %s1934
          %1940 = dma.vmem_to_hbm [thread:$0]  %s1935, 4096, %s1933, %s1921, 128, 128, 8
        $region48: #{tpu_custom_call.1} parent=43 // pred_fallthru
          _
      $region44: #{tpu_custom_call.1} parent=5 // pred_fallthru
        _
      %p1941 = scmp.le.s32.totalorder 2, %s15
      // Predicated region
      $region49: #{tpu_custom_call.1} parent=5 // pred_check
        %p1942 = pneg %p1941
      $region50: #{tpu_custom_call.1} parent=5 // pred_check_branch
        %1944 = sbr.rel (%p1942) target = $region52
      $region51: #{tpu_custom_call.1} parent=5 // pred_region
        %s1945 = ssub.s32 %s15, 2
        // Predicated region
        $region53: #{tpu_custom_call.1} parent=51 // pred_check
          %p1946 = pneg %p180
        $region54: #{tpu_custom_call.1} parent=51 // pred_check_branch
          %1948 = sbr.rel (%p1946) target = $region56
        $region55: #{tpu_custom_call.1} parent=51 // pred_region
          %s1949 = sand.u32 %s165, 1
          %s1950 = scalar_lea.sflag [#allocation3], %s1949
          %s1951 = sand.u32 %s165, 1
          %s1952 = smul.addr %s1951, 256
          %s1953 = scalar_lea.vmem [#allocation2], %s1952
          %1954 = dma.done %s1950, 4096
        $region56: #{tpu_custom_call.1} parent=51 // pred_fallthru
          _
      $region52: #{tpu_custom_call.1} parent=5 // pred_fallthru
        _
    $region6: #{tpu_custom_call.1} parent=1 // loop_footer
      %s19 = sadd.s32 1, %s15
    $region7: #{tpu_custom_call.1} parent=1 // loop_footer_branch
      %14 = sbr.rel target = $region3
    $region8: #{tpu_custom_call.1} parent=1 // loop_exit
      _
    %1955 = vsyncpa [#allocation3], 1
    %s1956 = scalar_lea.sflag [#allocation3], 1
    %1957 = vsyncpa %s1956, 1

</llo_original>
